<compile_context>
chip_gen: v7x
topology: tpu7x:2x2x1
jax: 0.10.0
libtpu: 0.0.40
codegen_flags: <defaults>
</compile_context>

<pallas_src>
import jax
import jax.numpy as jnp
from jax.experimental import pallas as pl
from jax.experimental.pallas import tpu as pltpu

# ---- small synthetic config (BERT-base would be H=768, 12 layers, 12 heads) ----
B, S = 2, 8              # batch, sequence length
HIDDEN = 32              # hidden size (stand-in for 768)
N_HEADS = 2
HEAD_DIM = HIDDEN // N_HEADS
INTERMEDIATE = 64        # FFN intermediate size (stand-in for 3072)
N_LAYERS = 2             # encoder layers (stand-in for 12)
VOCAB = 30               # BERT input-id vocab (synthetic)
MAX_POS = 16
N_CLASSES = 12           # n_vocab = number of distinct pitch classes from get_notes()
LOGIT_PAD = 128          # lane-dense padded classifier width (wrapper slices :N_CLASSES)
LN_EPS = 1e-12
ATTN_SCALE = 1.0 / (HEAD_DIM ** 0.5)   # folded into the Q projection weights at init


# ------------------------------ fused kernel ---------------------------------

def _layernorm(x, g, b):
    # y = (x - mean) / sqrt(var + eps) * gamma + beta   (f32 VPU/EUP work)
    mean = jnp.mean(x, axis=-1, keepdims=True)
    var = jnp.mean(jnp.square(x - mean), axis=-1, keepdims=True)
    inv = jax.lax.rsqrt(var + LN_EPS)
    return (x - mean) * inv * g + b


def bert_fused_kernel(
        emb_ref, mask_ref,                     # activations / additive mask
        emb_ln_g_ref, emb_ln_b_ref,            # embedding LayerNorm
        wqkv_ref, bqkv_ref, wo_ref, bo_ref,    # per-layer attention weights (stacked on L)
        ln1_g_ref, ln1_b_ref,
        wi_ref, bi_ref, wo2_ref, bo2_ref,      # per-layer FFN weights (stacked on L)
        ln2_g_ref, ln2_b_ref,
        pool_w_ref, pool_b_ref,                # pooler
        cls_w_ref, cls_b_ref,                  # classifier head (lane-padded to 128)
        out_ref):
    bsz, _, seq = mask_ref.shape               # (B, 1, S)
    rows, hidden = emb_ref.shape               # (B*S, H)
    n_layers = wqkv_ref.shape[0]
    head_dim = hidden // N_HEADS

    # --- embedding LayerNorm (no residual), f32 ---
    x = _layernorm(emb_ref[...], emb_ln_g_ref[...], emb_ln_b_ref[...])   # (B*S, H) f32
    mask_bias = mask_ref[...]                                            # (B, 1, S), 0 / -1e9

    # --- encoder layers (statically unrolled; weights resident in VMEM) ---
    for l in range(n_layers):
        # Fused Q|K|V projection: one (H, 3H) bf16 MXU push, f32 accumulation.
        # The 1/sqrt(head_dim) softmax scale is pre-folded into the Q columns of wqkv.
        qkv = jnp.dot(x.astype(jnp.bfloat16), wqkv_ref[l],
                      preferred_element_type=jnp.float32) + bqkv_ref[l]   # (B*S, 3H) f32

        # Per-head attention; heads are lane-column slices of the QKV slab.
        # TODO(synk): at real shapes (12 heads, S=512) move the head axis to a grid
        # dimension (keeps vregs lane-dense, avoids in-kernel transposes) instead of
        # this static Python loop.
        ctx_heads = []
        for h in range(N_HEADS):
            q = qkv[:, h * head_dim:(h + 1) * head_dim].reshape(bsz, seq, head_dim)
            k = qkv[:, hidden + h * head_dim:hidden + (h + 1) * head_dim].reshape(
                bsz, seq, head_dim)
            v = qkv[:, 2 * hidden + h * head_dim:2 * hidden + (h + 1) * head_dim].reshape(
                bsz, seq, head_dim)

            # QK^T via batched einsum contracting last dims; bf16 in, f32 out.
            scores = jnp.einsum('bqd,bkd->bqk',
                                q.astype(jnp.bfloat16), k.astype(jnp.bfloat16),
                                preferred_element_type=jnp.float32)       # (B, S, S)
            scores = scores + mask_bias                                   # broadcast over q rows
            s_max = jnp.max(scores, axis=-1, keepdims=True)
            p = jnp.exp(scores - s_max)                                   # f32 (EUP exp)
            denom = jnp.sum(p, axis=-1, keepdims=True)                    # (B, S, 1)

            ctx = jnp.einsum('bqk,bkd->bqd',
                             p.astype(jnp.bfloat16), v.astype(jnp.bfloat16),
                             preferred_element_type=jnp.float32)          # (B, S, dH)
            # Normalize the d-wide context, not the S-wide probabilities (fewer vmuls);
            # EUP reciprocal occupies its own bundle slot.
            ctx = ctx * pl.reciprocal(denom, approx=True)
            ctx_heads.append(ctx.reshape(rows, head_dim))

        # Concatenate heads along lanes -> single full-depth (K = H) output projection.
        ctx_all = jnp.concatenate(ctx_heads, axis=-1)                     # (B*S, H) f32
        attn_out = jnp.dot(ctx_all.astype(jnp.bfloat16), wo_ref[l],
                           preferred_element_type=jnp.float32) + bo_ref[l]

        # fused add + LayerNorm epilogue (f32)
        x = _layernorm(attn_out + x, ln1_g_ref[l], ln1_b_ref[l])

        # FFN: dense -> GELU -> dense, fused add + LayerNorm epilogue.
        # TODO(synk): BERT uses erf-GELU; tanh-approx GELU kept for simple Mosaic lowering.
        h_ff = jax.nn.gelu(
            jnp.dot(x.astype(jnp.bfloat16), wi_ref[l],
                    preferred_element_type=jnp.float32) + bi_ref[l],
            approximate=True)
        ffn_out = jnp.dot(h_ff.astype(jnp.bfloat16), wo2_ref[l],
                          preferred_element_type=jnp.float32) + bo2_ref[l]
        x = _layernorm(ffn_out + x, ln2_g_ref[l], ln2_b_ref[l])

    # --- BERT pooler (dense + tanh on [CLS]) + classifier (Linear + ReLU), fused ---
    # TODO(synk): at real S, gather the CLS rows (0, S, 2S, ...) with a strided sublane
    # read instead of this reshape+slice, which relayouts the whole (B,S,H) slab.
    cls = x.reshape(bsz, seq, hidden)[:, 0, :]                            # (B, H)
    pooled = jnp.tanh(
        jnp.dot(cls.astype(jnp.bfloat16), pool_w_ref[...],
                preferred_element_type=jnp.float32) + pool_b_ref[...])
    # Dropout(0.5) is identity at inference.
    logits = jnp.maximum(
        jnp.dot(pooled.astype(jnp.bfloat16), cls_w_ref[...],
                preferred_element_type=jnp.float32) + cls_b_ref[...],
        0.0)
    out_ref[...] = logits.astype(out_ref.dtype)                           # lane-dense (B, 128)


# --------------------------- parameters (deterministic) ----------------------

def init_params(key):
    keys = iter(jax.random.split(key, 128))

    def dense(fan_in, fan_out):
        return 0.02 * jax.random.normal(next(keys), (fan_in, fan_out), jnp.float32)

    p = {
        "word_emb": 0.02 * jax.random.normal(next(keys), (VOCAB, HIDDEN), jnp.float32),
        "pos_emb": 0.02 * jax.random.normal(next(keys), (MAX_POS, HIDDEN), jnp.float32),
        "type_emb": 0.02 * jax.random.normal(next(keys), (2, HIDDEN), jnp.float32),
        "emb_ln_g": jnp.ones((1, HIDDEN), jnp.float32),
        "emb_ln_b": jnp.zeros((1, HIDDEN), jnp.float32),
    }

    wqkv, bqkv, wo, bo = [], [], [], []
    ln1_g, ln1_b, ln2_g, ln2_b = [], [], [], []
    wi, bi, wo2, bo2 = [], [], [], []
    for _ in range(N_LAYERS):
        wq, wk, wv = dense(HIDDEN, HIDDEN), dense(HIDDEN, HIDDEN), dense(HIDDEN, HIDDEN)
        # 1/sqrt(head_dim) folded into Q projection (Q bias is zero so no bias scaling needed)
        wqkv.append(jnp.concatenate([wq * ATTN_SCALE, wk, wv], axis=1))   # (H, 3H) merged QKV
        bqkv.append(jnp.zeros((1, 3 * HIDDEN), jnp.float32))
        wo.append(dense(HIDDEN, HIDDEN));  bo.append(jnp.zeros((1, HIDDEN), jnp.float32))
        ln1_g.append(jnp.ones((1, HIDDEN), jnp.float32))
        ln1_b.append(jnp.zeros((1, HIDDEN), jnp.float32))
        wi.append(dense(HIDDEN, INTERMEDIATE))
        bi.append(jnp.zeros((1, INTERMEDIATE), jnp.float32))
        wo2.append(dense(INTERMEDIATE, HIDDEN))
        bo2.append(jnp.zeros((1, HIDDEN), jnp.float32))
        ln2_g.append(jnp.ones((1, HIDDEN), jnp.float32))
        ln2_b.append(jnp.zeros((1, HIDDEN), jnp.float32))

    bf16_weights = {"wqkv", "wo", "wi", "wo2"}   # matmul weights bf16; biases / LN stay f32
    for name, lst in [("wqkv", wqkv), ("bqkv", bqkv), ("wo", wo), ("bo", bo),
                      ("ln1_g", ln1_g), ("ln1_b", ln1_b),
                      ("wi", wi), ("bi", bi), ("wo2", wo2), ("bo2", bo2),
                      ("ln2_g", ln2_g), ("ln2_b", ln2_b)]:
        stacked = jnp.stack(lst)                                          # stacked on layer axis
        if name in bf16_weights:
            stacked = stacked.astype(jnp.bfloat16)
        p[name] = stacked

    p["pool_w"] = dense(HIDDEN, HIDDEN).astype(jnp.bfloat16)
    p["pool_b"] = jnp.zeros((1, HIDDEN), jnp.float32)
    cls_w = dense(HIDDEN, N_CLASSES)                                      # nn.Linear(768, n_vocab)
    p["cls_w"] = jnp.pad(cls_w, ((0, 0), (0, LOGIT_PAD - N_CLASSES))).astype(jnp.bfloat16)
    p["cls_b"] = jnp.zeros((1, LOGIT_PAD), jnp.float32)
    return p


# ------------------------------- forward pass --------------------------------

def bert_classifier_forward(params, input_ids, attention_mask):
    b, s = input_ids.shape

    # embeddings (gather is XLA glue; everything downstream is one fused Pallas kernel)
    # TODO(synk): at real vocab/hidden sizes fuse this lookup via PrefetchScalarGridSpec
    # (input_ids in SMEM + pl.Element row-gather on the HBM embedding table).
    we = jnp.take(params["word_emb"], input_ids, axis=0)                 # (B, S, H)
    pe = params["pos_emb"][:s][None, :, :]                               # (1, S, H)
    te = params["type_emb"][0][None, None, :]                            # (1, 1, H)
    emb = (we + pe + te).reshape(b * s, HIDDEN)                          # lane-dense (B*S, H)

    mask_bias = ((1.0 - attention_mask.astype(jnp.float32)) * -1e9)[:, None, :]  # (B, 1, S)

    vmem = pl.BlockSpec(memory_space=pltpu.MemorySpace.VMEM)
    logits_padded = pl.pallas_call(
        bert_fused_kernel,
        out_shape=jax.ShapeDtypeStruct((b, LOGIT_PAD), jnp.float32),
        in_specs=[vmem] * 20,
        out_specs=vmem,
        compiler_params=pltpu.CompilerParams(vmem_limit_bytes=32 * 1024 * 1024),
    )(emb, mask_bias,
      params["emb_ln_g"], params["emb_ln_b"],
      params["wqkv"], params["bqkv"], params["wo"], params["bo"],
      params["ln1_g"], params["ln1_b"],
      params["wi"], params["bi"], params["wo2"], params["bo2"],
      params["ln2_g"], params["ln2_b"],
      params["pool_w"], params["pool_b"], params["cls_w"], params["cls_b"])

    return logits_padded[:, :N_CLASSES]                                  # (B, N_CLASSES)


if __name__ == "__main__":
    key = jax.random.PRNGKey(0)
    pkey, ikey = jax.random.split(key)
    params = init_params(pkey)

    input_ids = jax.random.randint(ikey, (B, S), 0, VOCAB, dtype=jnp.int32)
    attention_mask = jnp.array([[1, 1, 1, 1, 1, 1, 0, 0],
                                [1, 1, 1, 1, 1, 1, 1, 1]], dtype=jnp.int32)

    fwd = jax.jit(bert_classifier_forward)
    out = fwd(params, input_ids, attention_mask)
    out = jax.block_until_ready(out)
    assert out.shape == (B, N_CLASSES)
    assert bool(jnp.all(out >= 0.0))  # ReLU output is non-negative
    print("KERNEL_OK")
</pallas_src>

<mosaic_0001>
module attributes {stable_mosaic.version = 11 : i64} {
  func.func @bert_fused_kernel(%arg0: memref<16x32xf32, #tpu.memory_space<vmem>>, %arg1: memref<2x1x8xf32, #tpu.memory_space<vmem>>, %arg2: memref<1x32xf32, #tpu.memory_space<vmem>>, %arg3: memref<1x32xf32, #tpu.memory_space<vmem>>, %arg4: memref<2x32x96xbf16, #tpu.memory_space<vmem>>, %arg5: memref<2x1x96xf32, #tpu.memory_space<vmem>>, %arg6: memref<2x32x32xbf16, #tpu.memory_space<vmem>>, %arg7: memref<2x1x32xf32, #tpu.memory_space<vmem>>, %arg8: memref<2x1x32xf32, #tpu.memory_space<vmem>>, %arg9: memref<2x1x32xf32, #tpu.memory_space<vmem>>, %arg10: memref<2x32x64xbf16, #tpu.memory_space<vmem>>, %arg11: memref<2x1x64xf32, #tpu.memory_space<vmem>>, %arg12: memref<2x64x32xbf16, #tpu.memory_space<vmem>>, %arg13: memref<2x1x32xf32, #tpu.memory_space<vmem>>, %arg14: memref<2x1x32xf32, #tpu.memory_space<vmem>>, %arg15: memref<2x1x32xf32, #tpu.memory_space<vmem>>, %arg16: memref<32x32xbf16, #tpu.memory_space<vmem>>, %arg17: memref<1x32xf32, #tpu.memory_space<vmem>>, %arg18: memref<32x128xbf16, #tpu.memory_space<vmem>>, %arg19: memref<1x128xf32, #tpu.memory_space<vmem>>, %arg20: memref<2x128xf32, #tpu.memory_space<vmem>>) attributes {dimension_semantics = [], scalar_prefetch = 0 : i64, scratch_operands = 0 : i64, tpu.core_type = #tpu.core_type<tc>} {
    %c0 = arith.constant 0 : index
    %c0_0 = arith.constant 0 : index
    %0 = vector.load %arg0[%c0, %c0_0] : memref<16x32xf32, #tpu.memory_space<vmem>>, vector<16x32xf32>
    %c0_1 = arith.constant 0 : index
    %c0_2 = arith.constant 0 : index
    %1 = vector.load %arg2[%c0_1, %c0_2] : memref<1x32xf32, #tpu.memory_space<vmem>>, vector<1x32xf32>
    %c0_3 = arith.constant 0 : index
    %c0_4 = arith.constant 0 : index
    %2 = vector.load %arg3[%c0_3, %c0_4] : memref<1x32xf32, #tpu.memory_space<vmem>>, vector<1x32xf32>
    %cst = arith.constant dense<0.000000e+00> : vector<16xf32>
    %3 = vector.multi_reduction <add>, %0, %cst [1] : vector<16x32xf32> to vector<16xf32>
    %4 = vector.shape_cast %3 : vector<16xf32> to vector<16x1xf32>
    %cst_5 = arith.constant 3.200000e+01 : f32
    %5 = vector.broadcast %cst_5 : f32 to vector<16x1xf32>
    %6 = arith.divf %4, %5 : vector<16x1xf32>
    %7 = vector.broadcast %6 : vector<16x1xf32> to vector<16x32xf32>
    %8 = arith.subf %0, %7 : vector<16x32xf32>
    %9 = arith.mulf %8, %8 : vector<16x32xf32>
    %cst_6 = arith.constant dense<0.000000e+00> : vector<16xf32>
    %10 = vector.multi_reduction <add>, %9, %cst_6 [1] : vector<16x32xf32> to vector<16xf32>
    %11 = vector.shape_cast %10 : vector<16xf32> to vector<16x1xf32>
    %cst_7 = arith.constant 3.200000e+01 : f32
    %12 = vector.broadcast %cst_7 : f32 to vector<16x1xf32>
    %13 = arith.divf %11, %12 : vector<16x1xf32>
    %cst_8 = arith.constant 9.99999996E-13 : f32
    %14 = vector.broadcast %cst_8 : f32 to vector<16x1xf32>
    %15 = arith.addf %13, %14 : vector<16x1xf32>
    %16 = math.rsqrt %15 : vector<16x1xf32>
    %17 = vector.broadcast %6 : vector<16x1xf32> to vector<16x32xf32>
    %18 = arith.subf %0, %17 : vector<16x32xf32>
    %19 = vector.broadcast %16 : vector<16x1xf32> to vector<16x32xf32>
    %20 = arith.mulf %18, %19 : vector<16x32xf32>
    %21 = vector.broadcast %1 : vector<1x32xf32> to vector<16x32xf32>
    %22 = arith.mulf %20, %21 : vector<16x32xf32>
    %23 = vector.broadcast %2 : vector<1x32xf32> to vector<16x32xf32>
    %24 = arith.addf %22, %23 : vector<16x32xf32>
    %c0_9 = arith.constant 0 : index
    %c0_10 = arith.constant 0 : index
    %c0_11 = arith.constant 0 : index
    %25 = vector.load %arg1[%c0_9, %c0_10, %c0_11] : memref<2x1x8xf32, #tpu.memory_space<vmem>>, vector<2x1x8xf32>
    %26 = arith.truncf %24 : vector<16x32xf32> to vector<16x32xbf16>
    %c0_12 = arith.constant 0 : index
    %c0_13 = arith.constant 0 : index
    %c0_14 = arith.constant 0 : index
    %27 = vector.load %arg4[%c0_12, %c0_13, %c0_14] : memref<2x32x96xbf16, #tpu.memory_space<vmem>>, vector<1x32x96xbf16>
    %28 = vector.shape_cast %27 : vector<1x32x96xbf16> to vector<32x96xbf16>
    %cst_15 = arith.constant dense<0.000000e+00> : vector<16x96xf32>
    %29 = tpu.matmul %26, %28, %cst_15 {dimension_numbers = #tpu.dot_dimension_numbers<[1], [0], [0], [1], [0, 0, 1, 1], [], []>} : vector<16x32xbf16>, vector<32x96xbf16>, vector<16x96xf32> -> vector<16x96xf32>
    %c0_16 = arith.constant 0 : index
    %c0_17 = arith.constant 0 : index
    %c0_18 = arith.constant 0 : index
    %30 = vector.load %arg5[%c0_16, %c0_17, %c0_18] : memref<2x1x96xf32, #tpu.memory_space<vmem>>, vector<1x1x96xf32>
    %31 = vector.shape_cast %30 : vector<1x1x96xf32> to vector<1x96xf32>
    %32 = vector.broadcast %31 : vector<1x96xf32> to vector<16x96xf32>
    %33 = arith.addf %29, %32 : vector<16x96xf32>
    %34 = vector.extract_strided_slice %33 {offsets = [0, 0], sizes = [16, 16], strides = [1, 1]} : vector<16x96xf32> to vector<16x16xf32>
    %35 = vector.shape_cast %34 : vector<16x16xf32> to vector<2x8x16xf32>
    %36 = vector.extract_strided_slice %33 {offsets = [0, 32], sizes = [16, 16], strides = [1, 1]} : vector<16x96xf32> to vector<16x16xf32>
    %37 = vector.shape_cast %36 : vector<16x16xf32> to vector<2x8x16xf32>
    %38 = vector.extract_strided_slice %33 {offsets = [0, 64], sizes = [16, 16], strides = [1, 1]} : vector<16x96xf32> to vector<16x16xf32>
    %39 = vector.shape_cast %38 : vector<16x16xf32> to vector<2x8x16xf32>
    %40 = arith.truncf %35 : vector<2x8x16xf32> to vector<2x8x16xbf16>
    %41 = arith.truncf %37 : vector<2x8x16xf32> to vector<2x8x16xbf16>
    "tpu.trace_start"() <{level = 10 : i32, message = "bqd,bkd->bqk"}> : () -> ()
    %cst_19 = arith.constant dense<0.000000e+00> : vector<2x8x8xf32>
    %42 = tpu.matmul %40, %41, %cst_19 {dimension_numbers = #tpu.dot_dimension_numbers<[2], [2], [1], [1], [0, 0, 0, 1, 1, 1], [0], [0]>} : vector<2x8x16xbf16>, vector<2x8x16xbf16>, vector<2x8x8xf32> -> vector<2x8x8xf32>
    "tpu.trace_stop"() : () -> ()
    %43 = vector.broadcast %25 : vector<2x1x8xf32> to vector<2x8x8xf32>
    %44 = arith.addf %42, %43 : vector<2x8x8xf32>
    %cst_20 = arith.constant dense<0xFF800000> : vector<2x8xf32>
    %45 = vector.multi_reduction <maximumf>, %44, %cst_20 [2] : vector<2x8x8xf32> to vector<2x8xf32>
    %46 = vector.shape_cast %45 : vector<2x8xf32> to vector<2x8x1xf32>
    %47 = vector.broadcast %46 : vector<2x8x1xf32> to vector<2x8x8xf32>
    %48 = arith.subf %44, %47 : vector<2x8x8xf32>
    %49 = math.exp %48 : vector<2x8x8xf32>
    %cst_21 = arith.constant dense<0.000000e+00> : vector<2x8xf32>
    %50 = vector.multi_reduction <add>, %49, %cst_21 [2] : vector<2x8x8xf32> to vector<2x8xf32>
    %51 = vector.shape_cast %50 : vector<2x8xf32> to vector<2x8x1xf32>
    %52 = arith.truncf %49 : vector<2x8x8xf32> to vector<2x8x8xbf16>
    %53 = arith.truncf %39 : vector<2x8x16xf32> to vector<2x8x16xbf16>
    "tpu.trace_start"() <{level = 10 : i32, message = "bqk,bkd->bqd"}> : () -> ()
    %cst_22 = arith.constant dense<0.000000e+00> : vector<2x8x16xf32>
    %54 = tpu.matmul %52, %53, %cst_22 {dimension_numbers = #tpu.dot_dimension_numbers<[2], [1], [1], [2], [0, 0, 0, 1, 1, 2], [0], [0]>} : vector<2x8x8xbf16>, vector<2x8x16xbf16>, vector<2x8x16xf32> -> vector<2x8x16xf32>
    "tpu.trace_stop"() : () -> ()
    %55 = tpu.reciprocal %51 {approx = true} : vector<2x8x1xf32> -> vector<2x8x1xf32>
    %56 = vector.broadcast %55 : vector<2x8x1xf32> to vector<2x8x16xf32>
    %57 = arith.mulf %54, %56 : vector<2x8x16xf32>
    %58 = vector.shape_cast %57 : vector<2x8x16xf32> to vector<16x16xf32>
    %59 = vector.extract_strided_slice %33 {offsets = [0, 16], sizes = [16, 16], strides = [1, 1]} : vector<16x96xf32> to vector<16x16xf32>
    %60 = vector.shape_cast %59 : vector<16x16xf32> to vector<2x8x16xf32>
    %61 = vector.extract_strided_slice %33 {offsets = [0, 48], sizes = [16, 16], strides = [1, 1]} : vector<16x96xf32> to vector<16x16xf32>
    %62 = vector.shape_cast %61 : vector<16x16xf32> to vector<2x8x16xf32>
    %63 = vector.extract_strided_slice %33 {offsets = [0, 80], sizes = [16, 16], strides = [1, 1]} : vector<16x96xf32> to vector<16x16xf32>
    %64 = vector.shape_cast %63 : vector<16x16xf32> to vector<2x8x16xf32>
    %65 = arith.truncf %60 : vector<2x8x16xf32> to vector<2x8x16xbf16>
    %66 = arith.truncf %62 : vector<2x8x16xf32> to vector<2x8x16xbf16>
    "tpu.trace_start"() <{level = 10 : i32, message = "bqd,bkd->bqk"}> : () -> ()
    %cst_23 = arith.constant dense<0.000000e+00> : vector<2x8x8xf32>
    %67 = tpu.matmul %65, %66, %cst_23 {dimension_numbers = #tpu.dot_dimension_numbers<[2], [2], [1], [1], [0, 0, 0, 1, 1, 1], [0], [0]>} : vector<2x8x16xbf16>, vector<2x8x16xbf16>, vector<2x8x8xf32> -> vector<2x8x8xf32>
    "tpu.trace_stop"() : () -> ()
    %68 = vector.broadcast %25 : vector<2x1x8xf32> to vector<2x8x8xf32>
    %69 = arith.addf %67, %68 : vector<2x8x8xf32>
    %cst_24 = arith.constant dense<0xFF800000> : vector<2x8xf32>
    %70 = vector.multi_reduction <maximumf>, %69, %cst_24 [2] : vector<2x8x8xf32> to vector<2x8xf32>
    %71 = vector.shape_cast %70 : vector<2x8xf32> to vector<2x8x1xf32>
    %72 = vector.broadcast %71 : vector<2x8x1xf32> to vector<2x8x8xf32>
    %73 = arith.subf %69, %72 : vector<2x8x8xf32>
    %74 = math.exp %73 : vector<2x8x8xf32>
    %cst_25 = arith.constant dense<0.000000e+00> : vector<2x8xf32>
    %75 = vector.multi_reduction <add>, %74, %cst_25 [2] : vector<2x8x8xf32> to vector<2x8xf32>
    %76 = vector.shape_cast %75 : vector<2x8xf32> to vector<2x8x1xf32>
    %77 = arith.truncf %74 : vector<2x8x8xf32> to vector<2x8x8xbf16>
    %78 = arith.truncf %64 : vector<2x8x16xf32> to vector<2x8x16xbf16>
    "tpu.trace_start"() <{level = 10 : i32, message = "bqk,bkd->bqd"}> : () -> ()
    %cst_26 = arith.constant dense<0.000000e+00> : vector<2x8x16xf32>
    %79 = tpu.matmul %77, %78, %cst_26 {dimension_numbers = #tpu.dot_dimension_numbers<[2], [1], [1], [2], [0, 0, 0, 1, 1, 2], [0], [0]>} : vector<2x8x8xbf16>, vector<2x8x16xbf16>, vector<2x8x16xf32> -> vector<2x8x16xf32>
    "tpu.trace_stop"() : () -> ()
    %80 = tpu.reciprocal %76 {approx = true} : vector<2x8x1xf32> -> vector<2x8x1xf32>
    %81 = vector.broadcast %80 : vector<2x8x1xf32> to vector<2x8x16xf32>
    %82 = arith.mulf %79, %81 : vector<2x8x16xf32>
    %83 = vector.shape_cast %82 : vector<2x8x16xf32> to vector<16x16xf32>
    %84 = tpu.concatenate %58, %83 in 1 : vector<16x16xf32>, vector<16x16xf32> -> vector<16x32xf32>
    %85 = arith.truncf %84 : vector<16x32xf32> to vector<16x32xbf16>
    %c0_27 = arith.constant 0 : index
    %c0_28 = arith.constant 0 : index
    %c0_29 = arith.constant 0 : index
    %86 = vector.load %arg6[%c0_27, %c0_28, %c0_29] : memref<2x32x32xbf16, #tpu.memory_space<vmem>>, vector<1x32x32xbf16>
    %87 = vector.shape_cast %86 : vector<1x32x32xbf16> to vector<32x32xbf16>
    %cst_30 = arith.constant dense<0.000000e+00> : vector<16x32xf32>
    %88 = tpu.matmul %85, %87, %cst_30 {dimension_numbers = #tpu.dot_dimension_numbers<[1], [0], [0], [1], [0, 0, 1, 1], [], []>} : vector<16x32xbf16>, vector<32x32xbf16>, vector<16x32xf32> -> vector<16x32xf32>
    %c0_31 = arith.constant 0 : index
    %c0_32 = arith.constant 0 : index
    %c0_33 = arith.constant 0 : index
    %89 = vector.load %arg7[%c0_31, %c0_32, %c0_33] : memref<2x1x32xf32, #tpu.memory_space<vmem>>, vector<1x1x32xf32>
    %90 = vector.shape_cast %89 : vector<1x1x32xf32> to vector<1x32xf32>
    %91 = vector.broadcast %90 : vector<1x32xf32> to vector<16x32xf32>
    %92 = arith.addf %88, %91 : vector<16x32xf32>
    %93 = arith.addf %92, %24 : vector<16x32xf32>
    %c0_34 = arith.constant 0 : index
    %c0_35 = arith.constant 0 : index
    %c0_36 = arith.constant 0 : index
    %94 = vector.load %arg8[%c0_34, %c0_35, %c0_36] : memref<2x1x32xf32, #tpu.memory_space<vmem>>, vector<1x1x32xf32>
    %95 = vector.shape_cast %94 : vector<1x1x32xf32> to vector<1x32xf32>
    %c0_37 = arith.constant 0 : index
    %c0_38 = arith.constant 0 : index
    %c0_39 = arith.constant 0 : index
    %96 = vector.load %arg9[%c0_37, %c0_38, %c0_39] : memref<2x1x32xf32, #tpu.memory_space<vmem>>, vector<1x1x32xf32>
    %97 = vector.shape_cast %96 : vector<1x1x32xf32> to vector<1x32xf32>
    %cst_40 = arith.constant dense<0.000000e+00> : vector<16xf32>
    %98 = vector.multi_reduction <add>, %93, %cst_40 [1] : vector<16x32xf32> to vector<16xf32>
    %99 = vector.shape_cast %98 : vector<16xf32> to vector<16x1xf32>
    %cst_41 = arith.constant 3.200000e+01 : f32
    %100 = vector.broadcast %cst_41 : f32 to vector<16x1xf32>
    %101 = arith.divf %99, %100 : vector<16x1xf32>
    %102 = vector.broadcast %101 : vector<16x1xf32> to vector<16x32xf32>
    %103 = arith.subf %93, %102 : vector<16x32xf32>
    %104 = arith.mulf %103, %103 : vector<16x32xf32>
    %cst_42 = arith.constant dense<0.000000e+00> : vector<16xf32>
    %105 = vector.multi_reduction <add>, %104, %cst_42 [1] : vector<16x32xf32> to vector<16xf32>
    %106 = vector.shape_cast %105 : vector<16xf32> to vector<16x1xf32>
    %cst_43 = arith.constant 3.200000e+01 : f32
    %107 = vector.broadcast %cst_43 : f32 to vector<16x1xf32>
    %108 = arith.divf %106, %107 : vector<16x1xf32>
    %cst_44 = arith.constant 9.99999996E-13 : f32
    %109 = vector.broadcast %cst_44 : f32 to vector<16x1xf32>
    %110 = arith.addf %108, %109 : vector<16x1xf32>
    %111 = math.rsqrt %110 : vector<16x1xf32>
    %112 = vector.broadcast %101 : vector<16x1xf32> to vector<16x32xf32>
    %113 = arith.subf %93, %112 : vector<16x32xf32>
    %114 = vector.broadcast %111 : vector<16x1xf32> to vector<16x32xf32>
    %115 = arith.mulf %113, %114 : vector<16x32xf32>
    %116 = vector.broadcast %95 : vector<1x32xf32> to vector<16x32xf32>
    %117 = arith.mulf %115, %116 : vector<16x32xf32>
    %118 = vector.broadcast %97 : vector<1x32xf32> to vector<16x32xf32>
    %119 = arith.addf %117, %118 : vector<16x32xf32>
    %120 = arith.truncf %119 : vector<16x32xf32> to vector<16x32xbf16>
    %c0_45 = arith.constant 0 : index
    %c0_46 = arith.constant 0 : index
    %c0_47 = arith.constant 0 : index
    %121 = vector.load %arg10[%c0_45, %c0_46, %c0_47] : memref<2x32x64xbf16, #tpu.memory_space<vmem>>, vector<1x32x64xbf16>
    %122 = vector.shape_cast %121 : vector<1x32x64xbf16> to vector<32x64xbf16>
    %cst_48 = arith.constant dense<0.000000e+00> : vector<16x64xf32>
    %123 = tpu.matmul %120, %122, %cst_48 {dimension_numbers = #tpu.dot_dimension_numbers<[1], [0], [0], [1], [0, 0, 1, 1], [], []>} : vector<16x32xbf16>, vector<32x64xbf16>, vector<16x64xf32> -> vector<16x64xf32>
    %c0_49 = arith.constant 0 : index
    %c0_50 = arith.constant 0 : index
    %c0_51 = arith.constant 0 : index
    %124 = vector.load %arg11[%c0_49, %c0_50, %c0_51] : memref<2x1x64xf32, #tpu.memory_space<vmem>>, vector<1x1x64xf32>
    %125 = vector.shape_cast %124 : vector<1x1x64xf32> to vector<1x64xf32>
    %126 = vector.broadcast %125 : vector<1x64xf32> to vector<16x64xf32>
    %127 = arith.addf %123, %126 : vector<16x64xf32>
    %128 = arith.mulf %127, %127 : vector<16x64xf32>
    %129 = arith.mulf %127, %128 : vector<16x64xf32>
    %cst_52 = arith.constant 4.471500e-02 : f32
    %130 = vector.broadcast %cst_52 : f32 to vector<16x64xf32>
    %131 = arith.mulf %130, %129 : vector<16x64xf32>
    %132 = arith.addf %127, %131 : vector<16x64xf32>
    %cst_53 = arith.constant 0.797884583 : f32
    %133 = vector.broadcast %cst_53 : f32 to vector<16x64xf32>
    %134 = arith.mulf %133, %132 : vector<16x64xf32>
    %135 = math.tanh %134 : vector<16x64xf32>
    %cst_54 = arith.constant 1.000000e+00 : f32
    %136 = vector.broadcast %cst_54 : f32 to vector<16x64xf32>
    %137 = arith.addf %136, %135 : vector<16x64xf32>
    %cst_55 = arith.constant 5.000000e-01 : f32
    %138 = vector.broadcast %cst_55 : f32 to vector<16x64xf32>
    %139 = arith.mulf %138, %137 : vector<16x64xf32>
    %140 = arith.mulf %127, %139 : vector<16x64xf32>
    %141 = arith.truncf %140 : vector<16x64xf32> to vector<16x64xbf16>
    %c0_56 = arith.constant 0 : index
    %c0_57 = arith.constant 0 : index
    %c0_58 = arith.constant 0 : index
    %142 = vector.load %arg12[%c0_56, %c0_57, %c0_58] : memref<2x64x32xbf16, #tpu.memory_space<vmem>>, vector<1x64x32xbf16>
    %143 = vector.shape_cast %142 : vector<1x64x32xbf16> to vector<64x32xbf16>
    %cst_59 = arith.constant dense<0.000000e+00> : vector<16x32xf32>
    %144 = tpu.matmul %141, %143, %cst_59 {dimension_numbers = #tpu.dot_dimension_numbers<[1], [0], [0], [1], [0, 0, 1, 1], [], []>} : vector<16x64xbf16>, vector<64x32xbf16>, vector<16x32xf32> -> vector<16x32xf32>
    %c0_60 = arith.constant 0 : index
    %c0_61 = arith.constant 0 : index
    %c0_62 = arith.constant 0 : index
    %145 = vector.load %arg13[%c0_60, %c0_61, %c0_62] : memref<2x1x32xf32, #tpu.memory_space<vmem>>, vector<1x1x32xf32>
    %146 = vector.shape_cast %145 : vector<1x1x32xf32> to vector<1x32xf32>
    %147 = vector.broadcast %146 : vector<1x32xf32> to vector<16x32xf32>
    %148 = arith.addf %144, %147 : vector<16x32xf32>
    %149 = arith.addf %148, %119 : vector<16x32xf32>
    %c0_63 = arith.constant 0 : index
    %c0_64 = arith.constant 0 : index
    %c0_65 = arith.constant 0 : index
    %150 = vector.load %arg14[%c0_63, %c0_64, %c0_65] : memref<2x1x32xf32, #tpu.memory_space<vmem>>, vector<1x1x32xf32>
    %151 = vector.shape_cast %150 : vector<1x1x32xf32> to vector<1x32xf32>
    %c0_66 = arith.constant 0 : index
    %c0_67 = arith.constant 0 : index
    %c0_68 = arith.constant 0 : index
    %152 = vector.load %arg15[%c0_66, %c0_67, %c0_68] : memref<2x1x32xf32, #tpu.memory_space<vmem>>, vector<1x1x32xf32>
    %153 = vector.shape_cast %152 : vector<1x1x32xf32> to vector<1x32xf32>
    %cst_69 = arith.constant dense<0.000000e+00> : vector<16xf32>
    %154 = vector.multi_reduction <add>, %149, %cst_69 [1] : vector<16x32xf32> to vector<16xf32>
    %155 = vector.shape_cast %154 : vector<16xf32> to vector<16x1xf32>
    %cst_70 = arith.constant 3.200000e+01 : f32
    %156 = vector.broadcast %cst_70 : f32 to vector<16x1xf32>
    %157 = arith.divf %155, %156 : vector<16x1xf32>
    %158 = vector.broadcast %157 : vector<16x1xf32> to vector<16x32xf32>
    %159 = arith.subf %149, %158 : vector<16x32xf32>
    %160 = arith.mulf %159, %159 : vector<16x32xf32>
    %cst_71 = arith.constant dense<0.000000e+00> : vector<16xf32>
    %161 = vector.multi_reduction <add>, %160, %cst_71 [1] : vector<16x32xf32> to vector<16xf32>
    %162 = vector.shape_cast %161 : vector<16xf32> to vector<16x1xf32>
    %cst_72 = arith.constant 3.200000e+01 : f32
    %163 = vector.broadcast %cst_72 : f32 to vector<16x1xf32>
    %164 = arith.divf %162, %163 : vector<16x1xf32>
    %cst_73 = arith.constant 9.99999996E-13 : f32
    %165 = vector.broadcast %cst_73 : f32 to vector<16x1xf32>
    %166 = arith.addf %164, %165 : vector<16x1xf32>
    %167 = math.rsqrt %166 : vector<16x1xf32>
    %168 = vector.broadcast %157 : vector<16x1xf32> to vector<16x32xf32>
    %169 = arith.subf %149, %168 : vector<16x32xf32>
    %170 = vector.broadcast %167 : vector<16x1xf32> to vector<16x32xf32>
    %171 = arith.mulf %169, %170 : vector<16x32xf32>
    %172 = vector.broadcast %151 : vector<1x32xf32> to vector<16x32xf32>
    %173 = arith.mulf %171, %172 : vector<16x32xf32>
    %174 = vector.broadcast %153 : vector<1x32xf32> to vector<16x32xf32>
    %175 = arith.addf %173, %174 : vector<16x32xf32>
    %176 = arith.truncf %175 : vector<16x32xf32> to vector<16x32xbf16>
    %c1 = arith.constant 1 : index
    %c0_74 = arith.constant 0 : index
    %c0_75 = arith.constant 0 : index
    %177 = vector.load %arg4[%c1, %c0_74, %c0_75] : memref<2x32x96xbf16, #tpu.memory_space<vmem>>, vector<1x32x96xbf16>
    %178 = vector.shape_cast %177 : vector<1x32x96xbf16> to vector<32x96xbf16>
    %cst_76 = arith.constant dense<0.000000e+00> : vector<16x96xf32>
    %179 = tpu.matmul %176, %178, %cst_76 {dimension_numbers = #tpu.dot_dimension_numbers<[1], [0], [0], [1], [0, 0, 1, 1], [], []>} : vector<16x32xbf16>, vector<32x96xbf16>, vector<16x96xf32> -> vector<16x96xf32>
    %c1_77 = arith.constant 1 : index
    %c0_78 = arith.constant 0 : index
    %c0_79 = arith.constant 0 : index
    %180 = vector.load %arg5[%c1_77, %c0_78, %c0_79] : memref<2x1x96xf32, #tpu.memory_space<vmem>>, vector<1x1x96xf32>
    %181 = vector.shape_cast %180 : vector<1x1x96xf32> to vector<1x96xf32>
    %182 = vector.broadcast %181 : vector<1x96xf32> to vector<16x96xf32>
    %183 = arith.addf %179, %182 : vector<16x96xf32>
    %184 = vector.extract_strided_slice %183 {offsets = [0, 0], sizes = [16, 16], strides = [1, 1]} : vector<16x96xf32> to vector<16x16xf32>
    %185 = vector.shape_cast %184 : vector<16x16xf32> to vector<2x8x16xf32>
    %186 = vector.extract_strided_slice %183 {offsets = [0, 32], sizes = [16, 16], strides = [1, 1]} : vector<16x96xf32> to vector<16x16xf32>
    %187 = vector.shape_cast %186 : vector<16x16xf32> to vector<2x8x16xf32>
    %188 = vector.extract_strided_slice %183 {offsets = [0, 64], sizes = [16, 16], strides = [1, 1]} : vector<16x96xf32> to vector<16x16xf32>
    %189 = vector.shape_cast %188 : vector<16x16xf32> to vector<2x8x16xf32>
    %190 = arith.truncf %185 : vector<2x8x16xf32> to vector<2x8x16xbf16>
    %191 = arith.truncf %187 : vector<2x8x16xf32> to vector<2x8x16xbf16>
    "tpu.trace_start"() <{level = 10 : i32, message = "bqd,bkd->bqk"}> : () -> ()
    %cst_80 = arith.constant dense<0.000000e+00> : vector<2x8x8xf32>
    %192 = tpu.matmul %190, %191, %cst_80 {dimension_numbers = #tpu.dot_dimension_numbers<[2], [2], [1], [1], [0, 0, 0, 1, 1, 1], [0], [0]>} : vector<2x8x16xbf16>, vector<2x8x16xbf16>, vector<2x8x8xf32> -> vector<2x8x8xf32>
    "tpu.trace_stop"() : () -> ()
    %193 = vector.broadcast %25 : vector<2x1x8xf32> to vector<2x8x8xf32>
    %194 = arith.addf %192, %193 : vector<2x8x8xf32>
    %cst_81 = arith.constant dense<0xFF800000> : vector<2x8xf32>
    %195 = vector.multi_reduction <maximumf>, %194, %cst_81 [2] : vector<2x8x8xf32> to vector<2x8xf32>
    %196 = vector.shape_cast %195 : vector<2x8xf32> to vector<2x8x1xf32>
    %197 = vector.broadcast %196 : vector<2x8x1xf32> to vector<2x8x8xf32>
    %198 = arith.subf %194, %197 : vector<2x8x8xf32>
    %199 = math.exp %198 : vector<2x8x8xf32>
    %cst_82 = arith.constant dense<0.000000e+00> : vector<2x8xf32>
    %200 = vector.multi_reduction <add>, %199, %cst_82 [2] : vector<2x8x8xf32> to vector<2x8xf32>
    %201 = vector.shape_cast %200 : vector<2x8xf32> to vector<2x8x1xf32>
    %202 = arith.truncf %199 : vector<2x8x8xf32> to vector<2x8x8xbf16>
    %203 = arith.truncf %189 : vector<2x8x16xf32> to vector<2x8x16xbf16>
    "tpu.trace_start"() <{level = 10 : i32, message = "bqk,bkd->bqd"}> : () -> ()
    %cst_83 = arith.constant dense<0.000000e+00> : vector<2x8x16xf32>
    %204 = tpu.matmul %202, %203, %cst_83 {dimension_numbers = #tpu.dot_dimension_numbers<[2], [1], [1], [2], [0, 0, 0, 1, 1, 2], [0], [0]>} : vector<2x8x8xbf16>, vector<2x8x16xbf16>, vector<2x8x16xf32> -> vector<2x8x16xf32>
    "tpu.trace_stop"() : () -> ()
    %205 = tpu.reciprocal %201 {approx = true} : vector<2x8x1xf32> -> vector<2x8x1xf32>
    %206 = vector.broadcast %205 : vector<2x8x1xf32> to vector<2x8x16xf32>
    %207 = arith.mulf %204, %206 : vector<2x8x16xf32>
    %208 = vector.shape_cast %207 : vector<2x8x16xf32> to vector<16x16xf32>
    %209 = vector.extract_strided_slice %183 {offsets = [0, 16], sizes = [16, 16], strides = [1, 1]} : vector<16x96xf32> to vector<16x16xf32>
    %210 = vector.shape_cast %209 : vector<16x16xf32> to vector<2x8x16xf32>
    %211 = vector.extract_strided_slice %183 {offsets = [0, 48], sizes = [16, 16], strides = [1, 1]} : vector<16x96xf32> to vector<16x16xf32>
    %212 = vector.shape_cast %211 : vector<16x16xf32> to vector<2x8x16xf32>
    %213 = vector.extract_strided_slice %183 {offsets = [0, 80], sizes = [16, 16], strides = [1, 1]} : vector<16x96xf32> to vector<16x16xf32>
    %214 = vector.shape_cast %213 : vector<16x16xf32> to vector<2x8x16xf32>
    %215 = arith.truncf %210 : vector<2x8x16xf32> to vector<2x8x16xbf16>
    %216 = arith.truncf %212 : vector<2x8x16xf32> to vector<2x8x16xbf16>
    "tpu.trace_start"() <{level = 10 : i32, message = "bqd,bkd->bqk"}> : () -> ()
    %cst_84 = arith.constant dense<0.000000e+00> : vector<2x8x8xf32>
    %217 = tpu.matmul %215, %216, %cst_84 {dimension_numbers = #tpu.dot_dimension_numbers<[2], [2], [1], [1], [0, 0, 0, 1, 1, 1], [0], [0]>} : vector<2x8x16xbf16>, vector<2x8x16xbf16>, vector<2x8x8xf32> -> vector<2x8x8xf32>
    "tpu.trace_stop"() : () -> ()
    %218 = vector.broadcast %25 : vector<2x1x8xf32> to vector<2x8x8xf32>
    %219 = arith.addf %217, %218 : vector<2x8x8xf32>
    %cst_85 = arith.constant dense<0xFF800000> : vector<2x8xf32>
    %220 = vector.multi_reduction <maximumf>, %219, %cst_85 [2] : vector<2x8x8xf32> to vector<2x8xf32>
    %221 = vector.shape_cast %220 : vector<2x8xf32> to vector<2x8x1xf32>
    %222 = vector.broadcast %221 : vector<2x8x1xf32> to vector<2x8x8xf32>
    %223 = arith.subf %219, %222 : vector<2x8x8xf32>
    %224 = math.exp %223 : vector<2x8x8xf32>
    %cst_86 = arith.constant dense<0.000000e+00> : vector<2x8xf32>
    %225 = vector.multi_reduction <add>, %224, %cst_86 [2] : vector<2x8x8xf32> to vector<2x8xf32>
    %226 = vector.shape_cast %225 : vector<2x8xf32> to vector<2x8x1xf32>
    %227 = arith.truncf %224 : vector<2x8x8xf32> to vector<2x8x8xbf16>
    %228 = arith.truncf %214 : vector<2x8x16xf32> to vector<2x8x16xbf16>
    "tpu.trace_start"() <{level = 10 : i32, message = "bqk,bkd->bqd"}> : () -> ()
    %cst_87 = arith.constant dense<0.000000e+00> : vector<2x8x16xf32>
    %229 = tpu.matmul %227, %228, %cst_87 {dimension_numbers = #tpu.dot_dimension_numbers<[2], [1], [1], [2], [0, 0, 0, 1, 1, 2], [0], [0]>} : vector<2x8x8xbf16>, vector<2x8x16xbf16>, vector<2x8x16xf32> -> vector<2x8x16xf32>
    "tpu.trace_stop"() : () -> ()
    %230 = tpu.reciprocal %226 {approx = true} : vector<2x8x1xf32> -> vector<2x8x1xf32>
    %231 = vector.broadcast %230 : vector<2x8x1xf32> to vector<2x8x16xf32>
    %232 = arith.mulf %229, %231 : vector<2x8x16xf32>
    %233 = vector.shape_cast %232 : vector<2x8x16xf32> to vector<16x16xf32>
    %234 = tpu.concatenate %208, %233 in 1 : vector<16x16xf32>, vector<16x16xf32> -> vector<16x32xf32>
    %235 = arith.truncf %234 : vector<16x32xf32> to vector<16x32xbf16>
    %c1_88 = arith.constant 1 : index
    %c0_89 = arith.constant 0 : index
    %c0_90 = arith.constant 0 : index
    %236 = vector.load %arg6[%c1_88, %c0_89, %c0_90] : memref<2x32x32xbf16, #tpu.memory_space<vmem>>, vector<1x32x32xbf16>
    %237 = vector.shape_cast %236 : vector<1x32x32xbf16> to vector<32x32xbf16>
    %cst_91 = arith.constant dense<0.000000e+00> : vector<16x32xf32>
    %238 = tpu.matmul %235, %237, %cst_91 {dimension_numbers = #tpu.dot_dimension_numbers<[1], [0], [0], [1], [0, 0, 1, 1], [], []>} : vector<16x32xbf16>, vector<32x32xbf16>, vector<16x32xf32> -> vector<16x32xf32>
    %c1_92 = arith.constant 1 : index
    %c0_93 = arith.constant 0 : index
    %c0_94 = arith.constant 0 : index
    %239 = vector.load %arg7[%c1_92, %c0_93, %c0_94] : memref<2x1x32xf32, #tpu.memory_space<vmem>>, vector<1x1x32xf32>
    %240 = vector.shape_cast %239 : vector<1x1x32xf32> to vector<1x32xf32>
    %241 = vector.broadcast %240 : vector<1x32xf32> to vector<16x32xf32>
    %242 = arith.addf %238, %241 : vector<16x32xf32>
    %243 = arith.addf %242, %175 : vector<16x32xf32>
    %c1_95 = arith.constant 1 : index
    %c0_96 = arith.constant 0 : index
    %c0_97 = arith.constant 0 : index
    %244 = vector.load %arg8[%c1_95, %c0_96, %c0_97] : memref<2x1x32xf32, #tpu.memory_space<vmem>>, vector<1x1x32xf32>
    %245 = vector.shape_cast %244 : vector<1x1x32xf32> to vector<1x32xf32>
    %c1_98 = arith.constant 1 : index
    %c0_99 = arith.constant 0 : index
    %c0_100 = arith.constant 0 : index
    %246 = vector.load %arg9[%c1_98, %c0_99, %c0_100] : memref<2x1x32xf32, #tpu.memory_space<vmem>>, vector<1x1x32xf32>
    %247 = vector.shape_cast %246 : vector<1x1x32xf32> to vector<1x32xf32>
    %cst_101 = arith.constant dense<0.000000e+00> : vector<16xf32>
    %248 = vector.multi_reduction <add>, %243, %cst_101 [1] : vector<16x32xf32> to vector<16xf32>
    %249 = vector.shape_cast %248 : vector<16xf32> to vector<16x1xf32>
    %cst_102 = arith.constant 3.200000e+01 : f32
    %250 = vector.broadcast %cst_102 : f32 to vector<16x1xf32>
    %251 = arith.divf %249, %250 : vector<16x1xf32>
    %252 = vector.broadcast %251 : vector<16x1xf32> to vector<16x32xf32>
    %253 = arith.subf %243, %252 : vector<16x32xf32>
    %254 = arith.mulf %253, %253 : vector<16x32xf32>
    %cst_103 = arith.constant dense<0.000000e+00> : vector<16xf32>
    %255 = vector.multi_reduction <add>, %254, %cst_103 [1] : vector<16x32xf32> to vector<16xf32>
    %256 = vector.shape_cast %255 : vector<16xf32> to vector<16x1xf32>
    %cst_104 = arith.constant 3.200000e+01 : f32
    %257 = vector.broadcast %cst_104 : f32 to vector<16x1xf32>
    %258 = arith.divf %256, %257 : vector<16x1xf32>
    %cst_105 = arith.constant 9.99999996E-13 : f32
    %259 = vector.broadcast %cst_105 : f32 to vector<16x1xf32>
    %260 = arith.addf %258, %259 : vector<16x1xf32>
    %261 = math.rsqrt %260 : vector<16x1xf32>
    %262 = vector.broadcast %251 : vector<16x1xf32> to vector<16x32xf32>
    %263 = arith.subf %243, %262 : vector<16x32xf32>
    %264 = vector.broadcast %261 : vector<16x1xf32> to vector<16x32xf32>
    %265 = arith.mulf %263, %264 : vector<16x32xf32>
    %266 = vector.broadcast %245 : vector<1x32xf32> to vector<16x32xf32>
    %267 = arith.mulf %265, %266 : vector<16x32xf32>
    %268 = vector.broadcast %247 : vector<1x32xf32> to vector<16x32xf32>
    %269 = arith.addf %267, %268 : vector<16x32xf32>
    %270 = arith.truncf %269 : vector<16x32xf32> to vector<16x32xbf16>
    %c1_106 = arith.constant 1 : index
    %c0_107 = arith.constant 0 : index
    %c0_108 = arith.constant 0 : index
    %271 = vector.load %arg10[%c1_106, %c0_107, %c0_108] : memref<2x32x64xbf16, #tpu.memory_space<vmem>>, vector<1x32x64xbf16>
    %272 = vector.shape_cast %271 : vector<1x32x64xbf16> to vector<32x64xbf16>
    %cst_109 = arith.constant dense<0.000000e+00> : vector<16x64xf32>
    %273 = tpu.matmul %270, %272, %cst_109 {dimension_numbers = #tpu.dot_dimension_numbers<[1], [0], [0], [1], [0, 0, 1, 1], [], []>} : vector<16x32xbf16>, vector<32x64xbf16>, vector<16x64xf32> -> vector<16x64xf32>
    %c1_110 = arith.constant 1 : index
    %c0_111 = arith.constant 0 : index
    %c0_112 = arith.constant 0 : index
    %274 = vector.load %arg11[%c1_110, %c0_111, %c0_112] : memref<2x1x64xf32, #tpu.memory_space<vmem>>, vector<1x1x64xf32>
    %275 = vector.shape_cast %274 : vector<1x1x64xf32> to vector<1x64xf32>
    %276 = vector.broadcast %275 : vector<1x64xf32> to vector<16x64xf32>
    %277 = arith.addf %273, %276 : vector<16x64xf32>
    %278 = arith.mulf %277, %277 : vector<16x64xf32>
    %279 = arith.mulf %277, %278 : vector<16x64xf32>
    %cst_113 = arith.constant 4.471500e-02 : f32
    %280 = vector.broadcast %cst_113 : f32 to vector<16x64xf32>
    %281 = arith.mulf %280, %279 : vector<16x64xf32>
    %282 = arith.addf %277, %281 : vector<16x64xf32>
    %cst_114 = arith.constant 0.797884583 : f32
    %283 = vector.broadcast %cst_114 : f32 to vector<16x64xf32>
    %284 = arith.mulf %283, %282 : vector<16x64xf32>
    %285 = math.tanh %284 : vector<16x64xf32>
    %cst_115 = arith.constant 1.000000e+00 : f32
    %286 = vector.broadcast %cst_115 : f32 to vector<16x64xf32>
    %287 = arith.addf %286, %285 : vector<16x64xf32>
    %cst_116 = arith.constant 5.000000e-01 : f32
    %288 = vector.broadcast %cst_116 : f32 to vector<16x64xf32>
    %289 = arith.mulf %288, %287 : vector<16x64xf32>
    %290 = arith.mulf %277, %289 : vector<16x64xf32>
    %291 = arith.truncf %290 : vector<16x64xf32> to vector<16x64xbf16>
    %c1_117 = arith.constant 1 : index
    %c0_118 = arith.constant 0 : index
    %c0_119 = arith.constant 0 : index
    %292 = vector.load %arg12[%c1_117, %c0_118, %c0_119] : memref<2x64x32xbf16, #tpu.memory_space<vmem>>, vector<1x64x32xbf16>
    %293 = vector.shape_cast %292 : vector<1x64x32xbf16> to vector<64x32xbf16>
    %cst_120 = arith.constant dense<0.000000e+00> : vector<16x32xf32>
    %294 = tpu.matmul %291, %293, %cst_120 {dimension_numbers = #tpu.dot_dimension_numbers<[1], [0], [0], [1], [0, 0, 1, 1], [], []>} : vector<16x64xbf16>, vector<64x32xbf16>, vector<16x32xf32> -> vector<16x32xf32>
    %c1_121 = arith.constant 1 : index
    %c0_122 = arith.constant 0 : index
    %c0_123 = arith.constant 0 : index
    %295 = vector.load %arg13[%c1_121, %c0_122, %c0_123] : memref<2x1x32xf32, #tpu.memory_space<vmem>>, vector<1x1x32xf32>
    %296 = vector.shape_cast %295 : vector<1x1x32xf32> to vector<1x32xf32>
    %297 = vector.broadcast %296 : vector<1x32xf32> to vector<16x32xf32>
    %298 = arith.addf %294, %297 : vector<16x32xf32>
    %299 = arith.addf %298, %269 : vector<16x32xf32>
    %c1_124 = arith.constant 1 : index
    %c0_125 = arith.constant 0 : index
    %c0_126 = arith.constant 0 : index
    %300 = vector.load %arg14[%c1_124, %c0_125, %c0_126] : memref<2x1x32xf32, #tpu.memory_space<vmem>>, vector<1x1x32xf32>
    %301 = vector.shape_cast %300 : vector<1x1x32xf32> to vector<1x32xf32>
    %c1_127 = arith.constant 1 : index
    %c0_128 = arith.constant 0 : index
    %c0_129 = arith.constant 0 : index
    %302 = vector.load %arg15[%c1_127, %c0_128, %c0_129] : memref<2x1x32xf32, #tpu.memory_space<vmem>>, vector<1x1x32xf32>
    %303 = vector.shape_cast %302 : vector<1x1x32xf32> to vector<1x32xf32>
    %cst_130 = arith.constant dense<0.000000e+00> : vector<16xf32>
    %304 = vector.multi_reduction <add>, %299, %cst_130 [1] : vector<16x32xf32> to vector<16xf32>
    %305 = vector.shape_cast %304 : vector<16xf32> to vector<16x1xf32>
    %cst_131 = arith.constant 3.200000e+01 : f32
    %306 = vector.broadcast %cst_131 : f32 to vector<16x1xf32>
    %307 = arith.divf %305, %306 : vector<16x1xf32>
    %308 = vector.broadcast %307 : vector<16x1xf32> to vector<16x32xf32>
    %309 = arith.subf %299, %308 : vector<16x32xf32>
    %310 = arith.mulf %309, %309 : vector<16x32xf32>
    %cst_132 = arith.constant dense<0.000000e+00> : vector<16xf32>
    %311 = vector.multi_reduction <add>, %310, %cst_132 [1] : vector<16x32xf32> to vector<16xf32>
    %312 = vector.shape_cast %311 : vector<16xf32> to vector<16x1xf32>
    %cst_133 = arith.constant 3.200000e+01 : f32
    %313 = vector.broadcast %cst_133 : f32 to vector<16x1xf32>
    %314 = arith.divf %312, %313 : vector<16x1xf32>
    %cst_134 = arith.constant 9.99999996E-13 : f32
    %315 = vector.broadcast %cst_134 : f32 to vector<16x1xf32>
    %316 = arith.addf %314, %315 : vector<16x1xf32>
    %317 = math.rsqrt %316 : vector<16x1xf32>
    %318 = vector.broadcast %307 : vector<16x1xf32> to vector<16x32xf32>
    %319 = arith.subf %299, %318 : vector<16x32xf32>
    %320 = vector.broadcast %317 : vector<16x1xf32> to vector<16x32xf32>
    %321 = arith.mulf %319, %320 : vector<16x32xf32>
    %322 = vector.broadcast %301 : vector<1x32xf32> to vector<16x32xf32>
    %323 = arith.mulf %321, %322 : vector<16x32xf32>
    %324 = vector.broadcast %303 : vector<1x32xf32> to vector<16x32xf32>
    %325 = arith.addf %323, %324 : vector<16x32xf32>
    %326 = vector.shape_cast %325 : vector<16x32xf32> to vector<2x8x32xf32>
    %327 = vector.extract_strided_slice %326 {offsets = [0, 0, 0], sizes = [2, 1, 32], strides = [1, 1, 1]} : vector<2x8x32xf32> to vector<2x1x32xf32>
    %328 = vector.shape_cast %327 : vector<2x1x32xf32> to vector<2x32xf32>
    %329 = arith.truncf %328 : vector<2x32xf32> to vector<2x32xbf16>
    %c0_135 = arith.constant 0 : index
    %c0_136 = arith.constant 0 : index
    %330 = vector.load %arg16[%c0_135, %c0_136] : memref<32x32xbf16, #tpu.memory_space<vmem>>, vector<32x32xbf16>
    %cst_137 = arith.constant dense<0.000000e+00> : vector<2x32xf32>
    %331 = tpu.matmul %329, %330, %cst_137 {dimension_numbers = #tpu.dot_dimension_numbers<[1], [0], [0], [1], [0, 0, 1, 1], [], []>} : vector<2x32xbf16>, vector<32x32xbf16>, vector<2x32xf32> -> vector<2x32xf32>
    %c0_138 = arith.constant 0 : index
    %c0_139 = arith.constant 0 : index
    %332 = vector.load %arg17[%c0_138, %c0_139] : memref<1x32xf32, #tpu.memory_space<vmem>>, vector<1x32xf32>
    %333 = vector.broadcast %332 : vector<1x32xf32> to vector<2x32xf32>
    %334 = arith.addf %331, %333 : vector<2x32xf32>
    %335 = math.tanh %334 : vector<2x32xf32>
    %336 = arith.truncf %335 : vector<2x32xf32> to vector<2x32xbf16>
    %c0_140 = arith.constant 0 : index
    %c0_141 = arith.constant 0 : index
    %337 = vector.load %arg18[%c0_140, %c0_141] : memref<32x128xbf16, #tpu.memory_space<vmem>>, vector<32x128xbf16>
    %cst_142 = arith.constant dense<0.000000e+00> : vector<2x128xf32>
    %338 = tpu.matmul %336, %337, %cst_142 {dimension_numbers = #tpu.dot_dimension_numbers<[1], [0], [0], [1], [0, 0, 1, 1], [], []>} : vector<2x32xbf16>, vector<32x128xbf16>, vector<2x128xf32> -> vector<2x128xf32>
    %c0_143 = arith.constant 0 : index
    %c0_144 = arith.constant 0 : index
    %339 = vector.load %arg19[%c0_143, %c0_144] : memref<1x128xf32, #tpu.memory_space<vmem>>, vector<1x128xf32>
    %340 = vector.broadcast %339 : vector<1x128xf32> to vector<2x128xf32>
    %341 = arith.addf %338, %340 : vector<2x128xf32>
    %cst_145 = arith.constant 0.000000e+00 : f32
    %342 = vector.broadcast %cst_145 : f32 to vector<2x128xf32>
    %343 = arith.maximumf %341, %342 : vector<2x128xf32>
    %c0_146 = arith.constant 0 : index
    %c0_147 = arith.constant 0 : index
    %344 = vector.load %arg20[%c0_146, %c0_147] : memref<2x128xf32, #tpu.memory_space<vmem>>, vector<2x128xf32>
    tpu.vector_store %arg20[%c0_146, %c0_147], %343 {strides = array<i32>} : memref<2x128xf32, #tpu.memory_space<vmem>>, vector<2x128xf32>,
    return
  }
}

</mosaic_0001>

<llo_original>
// kernel: bert_classifier_forward.1
$region0: #{bert_classifier_forward.1}
  #allocation0 [shape = 'u32[]', space=smem, size = 0x4, offset = 0x4, fixed_abs, tag = 'smem constant byte address 0x4 - core index']
  #allocation1 [shape = 'u32[144,128]{1,0:T(1,128)}', space=vmem, size = 0x12000, scoped, tag = 'internal scratch']
  %s0 = inlined_call_operand.vmem [shape: f32[16,32], index: 0, kind: input, shape index: {}]
  %s1 = inlined_call_operand.vmem [shape: f32[2,1,8], index: 1, kind: input, shape index: {}]
  %s2 = inlined_call_operand.vmem [shape: f32[1,32], index: 2, kind: input, shape index: {}]
  %s3 = inlined_call_operand.vmem [shape: f32[1,32], index: 3, kind: input, shape index: {}]
  %s4 = inlined_call_operand.vmem [shape: bf16[2,32,96], index: 4, kind: input, shape index: {}]
  %s5 = inlined_call_operand.vmem [shape: f32[2,1,96], index: 5, kind: input, shape index: {}]
  %s6 = inlined_call_operand.vmem [shape: bf16[2,32,32], index: 6, kind: input, shape index: {}]
  %s7 = inlined_call_operand.vmem [shape: f32[2,1,32], index: 7, kind: input, shape index: {}]
  %s8 = inlined_call_operand.vmem [shape: f32[2,1,32], index: 8, kind: input, shape index: {}]
  %s9 = inlined_call_operand.vmem [shape: f32[2,1,32], index: 9, kind: input, shape index: {}]
  %s10 = inlined_call_operand.vmem [shape: bf16[2,32,64], index: 10, kind: input, shape index: {}]
  %s11 = inlined_call_operand.vmem [shape: f32[2,1,64], index: 11, kind: input, shape index: {}]
  %s12 = inlined_call_operand.vmem [shape: bf16[2,64,32], index: 12, kind: input, shape index: {}]
  %s13 = inlined_call_operand.vmem [shape: f32[2,1,32], index: 13, kind: input, shape index: {}]
  %s14 = inlined_call_operand.vmem [shape: f32[2,1,32], index: 14, kind: input, shape index: {}]
  %s15 = inlined_call_operand.vmem [shape: f32[2,1,32], index: 15, kind: input, shape index: {}]
  %s16 = inlined_call_operand.vmem [shape: bf16[32,32], index: 16, kind: input, shape index: {}]
  %s17 = inlined_call_operand.vmem [shape: f32[1,32], index: 17, kind: input, shape index: {}]
  %s18 = inlined_call_operand.vmem [shape: bf16[32,128], index: 18, kind: input, shape index: {}]
  %s19 = inlined_call_operand.vmem [shape: f32[1,128], index: 19, kind: input, shape index: {}]
  %s20 = inlined_call_operand.hbm [shape: f32[2,128], index: 20, kind: output, shape index: {}]
  %s21 = sld [smem:[#allocation0]]
  $region90: #{bert_classifier_forward.1} parent=0
    _
  %s23 = ssub.s32 1, %s21
  %s24 = scalar_select 0, %s23, %s21
  $region1: #{bert_classifier_forward.1} parent=0
    #allocation2 [shape = 'u8[1024]{0}', space=vmem, size = 0x400, scoped, tag = 'output window, operand 0, single buffered']
    #allocation3 [shape = 's32[1]{0}', space=sflag, size = 0x4, scoped, tag = 'scoped memory for bert_classifier_forward.1']
    %25 = vsyncpa [#allocation3], 0
    // Predicated region
    $region2: #{bert_classifier_forward.1} parent=1 // pred_check
      _
    $region3: #{bert_classifier_forward.1} parent=1 // pred_check_branch
      %27 = sbr.rel (0) target = $region5
    $region4: #{bert_classifier_forward.1} parent=1 // pred_region
      _
    $region5: #{bert_classifier_forward.1} parent=1 // pred_fallthru
      _
    // Predicated region
    $region6: #{bert_classifier_forward.1} parent=1 // pred_check
      _
    $region7: #{bert_classifier_forward.1} parent=1 // pred_check_branch
      %29 = sbr.rel (0) target = $region9
    $region8: #{bert_classifier_forward.1} parent=1 // pred_region
      _
    $region9: #{bert_classifier_forward.1} parent=1 // pred_fallthru
      _
    // Predicated region
    $region10: #{bert_classifier_forward.1} parent=1 // pred_check
      _
    $region11: #{bert_classifier_forward.1} parent=1 // pred_check_branch
      %31 = sbr.rel (0) target = $region13
    $region12: #{bert_classifier_forward.1} parent=1 // pred_region
      _
    $region13: #{bert_classifier_forward.1} parent=1 // pred_fallthru
      _
    // Predicated region
    $region14: #{bert_classifier_forward.1} parent=1 // pred_check
      _
    $region15: #{bert_classifier_forward.1} parent=1 // pred_check_branch
      %33 = sbr.rel (0) target = $region17
    $region16: #{bert_classifier_forward.1} parent=1 // pred_region
      _
    $region17: #{bert_classifier_forward.1} parent=1 // pred_fallthru
      _
    // Predicated region
    $region18: #{bert_classifier_forward.1} parent=1 // pred_check
      _
    $region19: #{bert_classifier_forward.1} parent=1 // pred_check_branch
      %35 = sbr.rel (0) target = $region21
    $region20: #{bert_classifier_forward.1} parent=1 // pred_region
      _
    $region21: #{bert_classifier_forward.1} parent=1 // pred_fallthru
      _
    // Predicated region
    $region22: #{bert_classifier_forward.1} parent=1 // pred_check
      _
    $region23: #{bert_classifier_forward.1} parent=1 // pred_check_branch
      %37 = sbr.rel (0) target = $region25
    $region24: #{bert_classifier_forward.1} parent=1 // pred_region
      _
    $region25: #{bert_classifier_forward.1} parent=1 // pred_fallthru
      _
    // Predicated region
    $region26: #{bert_classifier_forward.1} parent=1 // pred_check
      _
    $region27: #{bert_classifier_forward.1} parent=1 // pred_check_branch
      %39 = sbr.rel (0) target = $region29
    $region28: #{bert_classifier_forward.1} parent=1 // pred_region
      _
    $region29: #{bert_classifier_forward.1} parent=1 // pred_fallthru
      _
    // Predicated region
    $region30: #{bert_classifier_forward.1} parent=1 // pred_check
      _
    $region31: #{bert_classifier_forward.1} parent=1 // pred_check_branch
      %41 = sbr.rel (0) target = $region33
    $region32: #{bert_classifier_forward.1} parent=1 // pred_region
      _
    $region33: #{bert_classifier_forward.1} parent=1 // pred_fallthru
      _
    // Predicated region
    $region34: #{bert_classifier_forward.1} parent=1 // pred_check
      _
    $region35: #{bert_classifier_forward.1} parent=1 // pred_check_branch
      %43 = sbr.rel (0) target = $region37
    $region36: #{bert_classifier_forward.1} parent=1 // pred_region
      _
    $region37: #{bert_classifier_forward.1} parent=1 // pred_fallthru
      _
    // Predicated region
    $region38: #{bert_classifier_forward.1} parent=1 // pred_check
      _
    $region39: #{bert_classifier_forward.1} parent=1 // pred_check_branch
      %45 = sbr.rel (0) target = $region41
    $region40: #{bert_classifier_forward.1} parent=1 // pred_region
      _
    $region41: #{bert_classifier_forward.1} parent=1 // pred_fallthru
      _
    // Predicated region
    $region42: #{bert_classifier_forward.1} parent=1 // pred_check
      _
    $region43: #{bert_classifier_forward.1} parent=1 // pred_check_branch
      %47 = sbr.rel (0) target = $region45
    $region44: #{bert_classifier_forward.1} parent=1 // pred_region
      _
    $region45: #{bert_classifier_forward.1} parent=1 // pred_fallthru
      _
    // Predicated region
    $region46: #{bert_classifier_forward.1} parent=1 // pred_check
      _
    $region47: #{bert_classifier_forward.1} parent=1 // pred_check_branch
      %49 = sbr.rel (0) target = $region49
    $region48: #{bert_classifier_forward.1} parent=1 // pred_region
      _
    $region49: #{bert_classifier_forward.1} parent=1 // pred_fallthru
      _
    // Predicated region
    $region50: #{bert_classifier_forward.1} parent=1 // pred_check
      _
    $region51: #{bert_classifier_forward.1} parent=1 // pred_check_branch
      %51 = sbr.rel (0) target = $region53
    $region52: #{bert_classifier_forward.1} parent=1 // pred_region
      _
    $region53: #{bert_classifier_forward.1} parent=1 // pred_fallthru
      _
    // Predicated region
    $region54: #{bert_classifier_forward.1} parent=1 // pred_check
      _
    $region55: #{bert_classifier_forward.1} parent=1 // pred_check_branch
      %53 = sbr.rel (0) target = $region57
    $region56: #{bert_classifier_forward.1} parent=1 // pred_region
      _
    $region57: #{bert_classifier_forward.1} parent=1 // pred_fallthru
      _
    // Predicated region
    $region58: #{bert_classifier_forward.1} parent=1 // pred_check
      _
    $region59: #{bert_classifier_forward.1} parent=1 // pred_check_branch
      %55 = sbr.rel (0) target = $region61
    $region60: #{bert_classifier_forward.1} parent=1 // pred_region
      _
    $region61: #{bert_classifier_forward.1} parent=1 // pred_fallthru
      _
    // Predicated region
    $region62: #{bert_classifier_forward.1} parent=1 // pred_check
      _
    $region63: #{bert_classifier_forward.1} parent=1 // pred_check_branch
      %57 = sbr.rel (0) target = $region65
    $region64: #{bert_classifier_forward.1} parent=1 // pred_region
      _
    $region65: #{bert_classifier_forward.1} parent=1 // pred_fallthru
      _
    // Predicated region
    $region66: #{bert_classifier_forward.1} parent=1 // pred_check
      _
    $region67: #{bert_classifier_forward.1} parent=1 // pred_check_branch
      %59 = sbr.rel (0) target = $region69
    $region68: #{bert_classifier_forward.1} parent=1 // pred_region
      _
    $region69: #{bert_classifier_forward.1} parent=1 // pred_fallthru
      _
    // Predicated region
    $region70: #{bert_classifier_forward.1} parent=1 // pred_check
      _
    $region71: #{bert_classifier_forward.1} parent=1 // pred_check_branch
      %61 = sbr.rel (0) target = $region73
    $region72: #{bert_classifier_forward.1} parent=1 // pred_region
      _
    $region73: #{bert_classifier_forward.1} parent=1 // pred_fallthru
      _
    // Predicated region
    $region74: #{bert_classifier_forward.1} parent=1 // pred_check
      _
    $region75: #{bert_classifier_forward.1} parent=1 // pred_check_branch
      %63 = sbr.rel (0) target = $region77
    $region76: #{bert_classifier_forward.1} parent=1 // pred_region
      _
    $region77: #{bert_classifier_forward.1} parent=1 // pred_fallthru
      _
    // Predicated region
    $region78: #{bert_classifier_forward.1} parent=1 // pred_check
      _
    $region79: #{bert_classifier_forward.1} parent=1 // pred_check_branch
      %65 = sbr.rel (0) target = $region81
    $region80: #{bert_classifier_forward.1} parent=1 // pred_region
      _
    $region81: #{bert_classifier_forward.1} parent=1 // pred_fallthru
      _
    %v67 = vld [vmem:[%s0] sm:$0xff]
    %v68 = vld [vmem:[%s0 + $0x8] sm:$0xff]
    %v69 = vld [vmem:[%s2] sm:$0x1]
    %v70 = vld [vmem:[%s3] sm:$0x1]
    %vm71 = vcmask 261120
    %v72 = vsel %vm71, %v67, 0.0
    %73 = vadd.xlane.f32.xlu0 %v72
    %v74 = vpop.xlane.xlu0 %73
    %v75 = vsel %vm71, %v68, 0.0
    %76 = vadd.xlane.f32.xlu0 %v75
    %v77 = vpop.xlane.xlu0 %76
    %v78 = vrcp.pop 32.0
    %v79 = vmul.f32 %v74, %v78
    %v80 = vmul.f32 %v77, %v78
    %v81 = vsub.f32 %v67, %v79
    %v82 = vsub.f32 %v68, %v80
    %v83 = vmul.f32 %v81, %v81
    %v84 = vmul.f32 %v82, %v82
    %v85 = vsel %vm71, %v83, 0.0
    %86 = vadd.xlane.f32.xlu0 %v85
    %v87 = vpop.xlane.xlu0 %86
    %v88 = vsel %vm71, %v84, 0.0
    %89 = vadd.xlane.f32.xlu0 %v88
    %v90 = vpop.xlane.xlu0 %89
    %v91 = vmul.f32 %v87, %v78
    %v92 = vmul.f32 %v90, %v78
    %v93 = vadd.f32 %v91, 1e-12
    %v94 = vadd.f32 %v92, 1e-12
    %v95 = vrsqrt.pop %v93
    %v96 = vrsqrt.pop %v94
    %v97 = vmul.f32 %v81, %v95
    %v98 = vmul.f32 %v82, %v96
    %v100 = vlaneseq
    %v101 = vshrl.u32 %v100, 7
    %v102 = vsub.s32 0, %v101
    %v103 = vrot.slane %v69, %v102
    %v105 = vmul.f32 %v97, %v103
    %v106 = vmul.f32 %v98, %v103
    %v108 = vlaneseq
    %v109 = vshrl.u32 %v108, 7
    %v110 = vsub.s32 0, %v109
    %v111 = vrot.slane %v70, %v110
    %v113 = vadd.f32 %v105, %v111
    %v114 = vadd.f32 %v106, %v111
    %v115 = vld [vmem:[%s1] sm:$0x1]
    %v116 = vld [vmem:[%s1 + $0x1] sm:$0x1]
    %v117 = vpack.c.bf16 %v114, %v113
    %v118 = vld [vmem:[%s4] sm:$0xf]
    %v119 = vld [vmem:[%s4 + $0x4] sm:$0xf]
    %v120 = vld [vmem:[%s4 + $0x8] sm:$0xf]
    %v121 = vld [vmem:[%s4 + $0xc] sm:$0xf]
    %v122 = vld [vmem:[%s5] sm:$0x1]
    %v124 = vlaneseq
    %v125 = vshrl.u32 %v124, 7
    %v126 = vsub.s32 0, %v125
    %v127 = vrot.slane %v122, %v126
    %v133 = vunpack.c.l.b16 %v118
    %v134 = vunpack.c.l.b16 %v119
    %v135 = vunpack.c.l.b16 %v120
    %v136 = vunpack.c.l.b16 %v121
    %v137 = vpack.c.b16 %v134, %v133
    %v138 = vpack.c.b16 %v136, %v135
    %v142 = vsel %vm71, %v117, 0
    %144 = vmatprep.subr.bf16.mxu0 0
    %145 = vmatpush1.bf16.msra.mxu0 %v137
    %146 = vmatprep.subr.bf16.mxu0 0
    %147 = vmatpush1.bf16.msra.mxu0 %v138
    %148 = vmatprep.subr.bf16.mxu0 0
    %149 = vmatpush1.bf16.msra.mxu0 0
    %150 = vmatprep.subr.bf16.mxu0 0
    %151 = vmatpush1.bf16.msra.mxu0 0
    %152 = vmatprep.subr.bf16.mxu0 0
    %153 = vmatpush1.bf16.msra.mxu0 0
    %154 = vmatprep.subr.bf16.mxu0 0
    %155 = vmatpush1.bf16.msra.mxu0 0
    %156 = vmatprep.subr.bf16.mxu0 0
    %157 = vmatpush1.bf16.msra.mxu0 0
    %158 = vmatprep.subr.bf16.mxu0 0
    %159 = vmatpush1.bf16.msra.mxu0 0
    %160 = vmatprep.subr.bf16.mxu0 0
    %161 = vmatpush1.bf16.msra.mxu0 0
    %162 = vmatprep.subr.bf16.mxu0 0
    %163 = vmatpush1.bf16.msra.mxu0 0
    %164 = vmatprep.subr.bf16.mxu0 0
    %165 = vmatpush1.bf16.msra.mxu0 0
    %166 = vmatprep.subr.bf16.mxu0 0
    %167 = vmatpush1.bf16.msra.mxu0 0
    %168 = vmatprep.subr.bf16.mxu0 0
    %169 = vmatpush1.bf16.msra.mxu0 0
    %170 = vmatprep.subr.bf16.mxu0 0
    %171 = vmatpush1.bf16.msra.mxu0 0
    %172 = vmatprep.subr.bf16.mxu0 0
    %173 = vmatpush1.bf16.msra.mxu0 0
    %174 = vmatprep.subr.bf16.mxu0 0
    %175 = vmatpush1.bf16.msra.mxu0 0
    %176 = vmatprep.mubr.bf16.mxu0 0
    %177 = vmatmul.mubr.bf16.gmra.mrb[0].mxu0 %v142
    %v178 = vpop.f32.mrb[0].mxu0
    %v179 = vadd.f32 %v127, %v178
    %v180 = vpop.f32.mrb[0].mxu0
    %v181 = vpop.f32.mrb[0].mxu0
    %v182 = vadd.f32 %v127, %v181
    %v183 = vpop.f32.mrb[0].mxu0
    %184 = vdwg.mxu0
    %v185 = vpack.c.bf16 %v179, %v179
    %v186 = vpack.c.bf16 %v182, %v182
    %v189 = vlaneseq
    %v190 = vshrl.u32 %v189, 7
    %v191 = vsub.s32 0, %v190
    %v192 = vrot.slane %v115, %v191
    %v193 = vlaneseq
    %v194 = vshrl.u32 %v193, 7
    %v195 = vsub.s32 0, %v194
    %v196 = vrot.slane %v116, %v195
    %200 = vrot.lane.b32.xlu0 %v185, 96
    %v201 = vpop.permute.xlu0 %200
    %vm202 = vcmask 130048
    %v204 = vsel %vm202, %v185, 0
    %v207 = vsel %vm202, %v201, 0
    %209 = vmatprep.subr.bf16.mxu0 0
    %210 = vmatpush1.bf16.xpose.msra.mxu0 %v207
    %211 = vmatprep.subr.bf16.mxu0 0
    %212 = vmatpush1.bf16.xpose.msra.mxu0 0
    %213 = vmatprep.subr.bf16.mxu0 0
    %214 = vmatpush1.bf16.xpose.msra.mxu0 0
    %215 = vmatprep.subr.bf16.mxu0 0
    %216 = vmatpush1.bf16.xpose.msra.mxu0 0
    %217 = vmatprep.subr.bf16.mxu0 0
    %218 = vmatpush1.bf16.xpose.msra.mxu0 0
    %219 = vmatprep.subr.bf16.mxu0 0
    %220 = vmatpush1.bf16.xpose.msra.mxu0 0
    %221 = vmatprep.subr.bf16.mxu0 0
    %222 = vmatpush1.bf16.xpose.msra.mxu0 0
    %223 = vmatprep.subr.bf16.mxu0 0
    %224 = vmatpush1.bf16.xpose.msra.mxu0 0
    %225 = vmatprep.subr.bf16.mxu0 0
    %226 = vmatpush1.bf16.xpose.msra.mxu0 0
    %227 = vmatprep.subr.bf16.mxu0 0
    %228 = vmatpush1.bf16.xpose.msra.mxu0 0
    %229 = vmatprep.subr.bf16.mxu0 0
    %230 = vmatpush1.bf16.xpose.msra.mxu0 0
    %231 = vmatprep.subr.bf16.mxu0 0
    %232 = vmatpush1.bf16.xpose.msra.mxu0 0
    %233 = vmatprep.subr.bf16.mxu0 0
    %234 = vmatpush1.bf16.xpose.msra.mxu0 0
    %235 = vmatprep.subr.bf16.mxu0 0
    %236 = vmatpush1.bf16.xpose.msra.mxu0 0
    %237 = vmatprep.subr.bf16.mxu0 0
    %238 = vmatpush1.bf16.xpose.msra.mxu0 0
    %239 = vmatprep.subr.bf16.mxu0 0
    %240 = vmatpush1.bf16.xpose.msra.mxu0 0
    %241 = vmatprep.mubr.bf16.mxu0 0
    %242 = vmatmul.mubr.bf16.gmra.mrb[0].mxu0 %v204
    %v243 = vpop.f32.mrb[0].mxu0
    %v244 = vadd.f32 %v192, %v243
    %v245 = vpop.f32.mrb[0].mxu0
    %v246 = vpop.f32.mrb[0].mxu0
    %v247 = vpop.f32.mrb[0].mxu0
    %248 = vdwg.mxu0
    %250 = vrot.lane.b32.xlu0 %v186, 96
    %v251 = vpop.permute.xlu0 %250
    %v253 = vsel %vm202, %v186, 0
    %v256 = vsel %vm202, %v251, 0
    %258 = vmatprep.subr.bf16.mxu0 0
    %259 = vmatpush1.bf16.xpose.msra.mxu0 %v256
    %260 = vmatprep.subr.bf16.mxu0 0
    %261 = vmatpush1.bf16.xpose.msra.mxu0 0
    %262 = vmatprep.subr.bf16.mxu0 0
    %263 = vmatpush1.bf16.xpose.msra.mxu0 0
    %264 = vmatprep.subr.bf16.mxu0 0
    %265 = vmatpush1.bf16.xpose.msra.mxu0 0
    %266 = vmatprep.subr.bf16.mxu0 0
    %267 = vmatpush1.bf16.xpose.msra.mxu0 0
    %268 = vmatprep.subr.bf16.mxu0 0
    %269 = vmatpush1.bf16.xpose.msra.mxu0 0
    %270 = vmatprep.subr.bf16.mxu0 0
    %271 = vmatpush1.bf16.xpose.msra.mxu0 0
    %272 = vmatprep.subr.bf16.mxu0 0
    %273 = vmatpush1.bf16.xpose.msra.mxu0 0
    %274 = vmatprep.subr.bf16.mxu0 0
    %275 = vmatpush1.bf16.xpose.msra.mxu0 0
    %276 = vmatprep.subr.bf16.mxu0 0
    %277 = vmatpush1.bf16.xpose.msra.mxu0 0
    %278 = vmatprep.subr.bf16.mxu0 0
    %279 = vmatpush1.bf16.xpose.msra.mxu0 0
    %280 = vmatprep.subr.bf16.mxu0 0
    %281 = vmatpush1.bf16.xpose.msra.mxu0 0
    %282 = vmatprep.subr.bf16.mxu0 0
    %283 = vmatpush1.bf16.xpose.msra.mxu0 0
    %284 = vmatprep.subr.bf16.mxu0 0
    %285 = vmatpush1.bf16.xpose.msra.mxu0 0
    %286 = vmatprep.subr.bf16.mxu0 0
    %287 = vmatpush1.bf16.xpose.msra.mxu0 0
    %288 = vmatprep.subr.bf16.mxu0 0
    %289 = vmatpush1.bf16.xpose.msra.mxu0 0
    %290 = vmatprep.mubr.bf16.mxu0 0
    %291 = vmatmul.mubr.bf16.gmra.mrb[0].mxu0 %v253
    %v292 = vpop.f32.mrb[0].mxu0
    %v293 = vadd.f32 %v196, %v292
    %v294 = vpop.f32.mrb[0].mxu0
    %v295 = vpop.f32.mrb[0].mxu0
    %v296 = vpop.f32.mrb[0].mxu0
    %297 = vdwg.mxu0
    %vm298 = vcmask 64512
    %v299 = vsel %vm298, %v244, -inf
    %300 = vmax.xlane.f32.xlu0 %v299
    %v301 = vpop.xlane.xlu0 %300
    %v302 = vsel %vm298, %v293, -inf
    %303 = vmax.xlane.f32.xlu0 %v302
    %v304 = vpop.xlane.xlu0 %303
    %v305 = vsub.f32 %v244, %v301
    %v306 = vsub.f32 %v293, %v304
    %v307 = vmul.f32 %v305, 1.442695
    %v308 = vpow.pop %v307
    %v309 = vmul.f32 %v306, 1.442695
    %v310 = vpow.pop %v309
    %v311 = vsel %vm298, %v308, 0.0
    %312 = vadd.xlane.f32.xlu0 %v311
    %v313 = vpop.xlane.xlu0 %312
    %v314 = vsel %vm298, %v310, 0.0
    %315 = vadd.xlane.f32.xlu0 %v314
    %v316 = vpop.xlane.xlu0 %315
    %v317 = vpack.c.bf16 %v308, %v308
    %v318 = vpack.c.bf16 %v310, %v310
    %319 = vrot.lane.b32.xlu0 %v185, 64
    %v320 = vpop.permute.xlu0 %319
    %v322 = vsel %vm298, %v317, 0
    %vm324 = vcmask 1043456
    %v326 = vsel %vm324, %v320, 0
    %328 = vmatprep.subr.bf16.mxu0 0
    %329 = vmatpush1.bf16.msra.mxu0 %v326
    %330 = vmatprep.subr.bf16.mxu0 0
    %331 = vmatpush1.bf16.msra.mxu0 0
    %332 = vmatprep.subr.bf16.mxu0 0
    %333 = vmatpush1.bf16.msra.mxu0 0
    %334 = vmatprep.subr.bf16.mxu0 0
    %335 = vmatpush1.bf16.msra.mxu0 0
    %336 = vmatprep.subr.bf16.mxu0 0
    %337 = vmatpush1.bf16.msra.mxu0 0
    %338 = vmatprep.subr.bf16.mxu0 0
    %339 = vmatpush1.bf16.msra.mxu0 0
    %340 = vmatprep.subr.bf16.mxu0 0
    %341 = vmatpush1.bf16.msra.mxu0 0
    %342 = vmatprep.subr.bf16.mxu0 0
    %343 = vmatpush1.bf16.msra.mxu0 0
    %344 = vmatprep.subr.bf16.mxu0 0
    %345 = vmatpush1.bf16.msra.mxu0 0
    %346 = vmatprep.subr.bf16.mxu0 0
    %347 = vmatpush1.bf16.msra.mxu0 0
    %348 = vmatprep.subr.bf16.mxu0 0
    %349 = vmatpush1.bf16.msra.mxu0 0
    %350 = vmatprep.subr.bf16.mxu0 0
    %351 = vmatpush1.bf16.msra.mxu0 0
    %352 = vmatprep.subr.bf16.mxu0 0
    %353 = vmatpush1.bf16.msra.mxu0 0
    %354 = vmatprep.subr.bf16.mxu0 0
    %355 = vmatpush1.bf16.msra.mxu0 0
    %356 = vmatprep.subr.bf16.mxu0 0
    %357 = vmatpush1.bf16.msra.mxu0 0
    %358 = vmatprep.subr.bf16.mxu0 0
    %359 = vmatpush1.bf16.msra.mxu0 0
    %360 = vmatprep.mubr.bf16.mxu0 0
    %361 = vmatmul.mubr.bf16.gmra.mrb[0].mxu0 %v322
    %v362 = vpop.f32.mrb[0].mxu0
    %v363 = vadd.f32 0.0, %v362
    %v364 = vpop.f32.mrb[0].mxu0
    %v365 = vpop.f32.mrb[0].mxu0
    %v366 = vpop.f32.mrb[0].mxu0
    %367 = vdwg.mxu0
    %368 = vrot.lane.b32.xlu0 %v186, 64
    %v369 = vpop.permute.xlu0 %368
    %v371 = vsel %vm298, %v318, 0
    %v374 = vsel %vm324, %v369, 0
    %376 = vmatprep.subr.bf16.mxu0 0
    %377 = vmatpush1.bf16.msra.mxu0 %v374
    %378 = vmatprep.subr.bf16.mxu0 0
    %379 = vmatpush1.bf16.msra.mxu0 0
    %380 = vmatprep.subr.bf16.mxu0 0
    %381 = vmatpush1.bf16.msra.mxu0 0
    %382 = vmatprep.subr.bf16.mxu0 0
    %383 = vmatpush1.bf16.msra.mxu0 0
    %384 = vmatprep.subr.bf16.mxu0 0
    %385 = vmatpush1.bf16.msra.mxu0 0
    %386 = vmatprep.subr.bf16.mxu0 0
    %387 = vmatpush1.bf16.msra.mxu0 0
    %388 = vmatprep.subr.bf16.mxu0 0
    %389 = vmatpush1.bf16.msra.mxu0 0
    %390 = vmatprep.subr.bf16.mxu0 0
    %391 = vmatpush1.bf16.msra.mxu0 0
    %392 = vmatprep.subr.bf16.mxu0 0
    %393 = vmatpush1.bf16.msra.mxu0 0
    %394 = vmatprep.subr.bf16.mxu0 0
    %395 = vmatpush1.bf16.msra.mxu0 0
    %396 = vmatprep.subr.bf16.mxu0 0
    %397 = vmatpush1.bf16.msra.mxu0 0
    %398 = vmatprep.subr.bf16.mxu0 0
    %399 = vmatpush1.bf16.msra.mxu0 0
    %400 = vmatprep.subr.bf16.mxu0 0
    %401 = vmatpush1.bf16.msra.mxu0 0
    %402 = vmatprep.subr.bf16.mxu0 0
    %403 = vmatpush1.bf16.msra.mxu0 0
    %404 = vmatprep.subr.bf16.mxu0 0
    %405 = vmatpush1.bf16.msra.mxu0 0
    %406 = vmatprep.subr.bf16.mxu0 0
    %407 = vmatpush1.bf16.msra.mxu0 0
    %408 = vmatprep.mubr.bf16.mxu0 0
    %409 = vmatmul.mubr.bf16.gmra.mrb[0].mxu0 %v371
    %v410 = vpop.f32.mrb[0].mxu0
    %v411 = vadd.f32 0.0, %v410
    %v412 = vpop.f32.mrb[0].mxu0
    %v413 = vpop.f32.mrb[0].mxu0
    %v414 = vpop.f32.mrb[0].mxu0
    %415 = vdwg.mxu0
    %v416 = vrcp.pop %v313
    %v417 = vrcp.pop %v316
    %v418 = vmul.f32 %v363, %v416
    %v419 = vmul.f32 %v411, %v417
    %420 = vrot.lane.b32.xlu0 %v185, 112
    %v421 = vpop.permute.xlu0 %420
    %422 = vrot.lane.b32.xlu0 %v185, 80
    %v423 = vpop.permute.xlu0 %422
    %v425 = vsel %vm202, %v421, 0
    %v428 = vsel %vm202, %v423, 0
    %430 = vmatprep.subr.bf16.mxu0 0
    %431 = vmatpush1.bf16.xpose.msra.mxu0 %v428
    %432 = vmatprep.subr.bf16.mxu0 0
    %433 = vmatpush1.bf16.xpose.msra.mxu0 0
    %434 = vmatprep.subr.bf16.mxu0 0
    %435 = vmatpush1.bf16.xpose.msra.mxu0 0
    %436 = vmatprep.subr.bf16.mxu0 0
    %437 = vmatpush1.bf16.xpose.msra.mxu0 0
    %438 = vmatprep.subr.bf16.mxu0 0
    %439 = vmatpush1.bf16.xpose.msra.mxu0 0
    %440 = vmatprep.subr.bf16.mxu0 0
    %441 = vmatpush1.bf16.xpose.msra.mxu0 0
    %442 = vmatprep.subr.bf16.mxu0 0
    %443 = vmatpush1.bf16.xpose.msra.mxu0 0
    %444 = vmatprep.subr.bf16.mxu0 0
    %445 = vmatpush1.bf16.xpose.msra.mxu0 0
    %446 = vmatprep.subr.bf16.mxu0 0
    %447 = vmatpush1.bf16.xpose.msra.mxu0 0
    %448 = vmatprep.subr.bf16.mxu0 0
    %449 = vmatpush1.bf16.xpose.msra.mxu0 0
    %450 = vmatprep.subr.bf16.mxu0 0
    %451 = vmatpush1.bf16.xpose.msra.mxu0 0
    %452 = vmatprep.subr.bf16.mxu0 0
    %453 = vmatpush1.bf16.xpose.msra.mxu0 0
    %454 = vmatprep.subr.bf16.mxu0 0
    %455 = vmatpush1.bf16.xpose.msra.mxu0 0
    %456 = vmatprep.subr.bf16.mxu0 0
    %457 = vmatpush1.bf16.xpose.msra.mxu0 0
    %458 = vmatprep.subr.bf16.mxu0 0
    %459 = vmatpush1.bf16.xpose.msra.mxu0 0
    %460 = vmatprep.subr.bf16.mxu0 0
    %461 = vmatpush1.bf16.xpose.msra.mxu0 0
    %462 = vmatprep.mubr.bf16.mxu0 0
    %463 = vmatmul.mubr.bf16.gmra.mrb[0].mxu0 %v425
    %v464 = vpop.f32.mrb[0].mxu0
    %v465 = vadd.f32 %v192, %v464
    %v466 = vpop.f32.mrb[0].mxu0
    %v467 = vpop.f32.mrb[0].mxu0
    %v468 = vpop.f32.mrb[0].mxu0
    %469 = vdwg.mxu0
    %470 = vrot.lane.b32.xlu0 %v186, 112
    %v471 = vpop.permute.xlu0 %470
    %472 = vrot.lane.b32.xlu0 %v186, 80
    %v473 = vpop.permute.xlu0 %472
    %v475 = vsel %vm202, %v471, 0
    %v478 = vsel %vm202, %v473, 0
    %480 = vmatprep.subr.bf16.mxu0 0
    %481 = vmatpush1.bf16.xpose.msra.mxu0 %v478
    %482 = vmatprep.subr.bf16.mxu0 0
    %483 = vmatpush1.bf16.xpose.msra.mxu0 0
    %484 = vmatprep.subr.bf16.mxu0 0
    %485 = vmatpush1.bf16.xpose.msra.mxu0 0
    %486 = vmatprep.subr.bf16.mxu0 0
    %487 = vmatpush1.bf16.xpose.msra.mxu0 0
    %488 = vmatprep.subr.bf16.mxu0 0
    %489 = vmatpush1.bf16.xpose.msra.mxu0 0
    %490 = vmatprep.subr.bf16.mxu0 0
    %491 = vmatpush1.bf16.xpose.msra.mxu0 0
    %492 = vmatprep.subr.bf16.mxu0 0
    %493 = vmatpush1.bf16.xpose.msra.mxu0 0
    %494 = vmatprep.subr.bf16.mxu0 0
    %495 = vmatpush1.bf16.xpose.msra.mxu0 0
    %496 = vmatprep.subr.bf16.mxu0 0
    %497 = vmatpush1.bf16.xpose.msra.mxu0 0
    %498 = vmatprep.subr.bf16.mxu0 0
    %499 = vmatpush1.bf16.xpose.msra.mxu0 0
    %500 = vmatprep.subr.bf16.mxu0 0
    %501 = vmatpush1.bf16.xpose.msra.mxu0 0
    %502 = vmatprep.subr.bf16.mxu0 0
    %503 = vmatpush1.bf16.xpose.msra.mxu0 0
    %504 = vmatprep.subr.bf16.mxu0 0
    %505 = vmatpush1.bf16.xpose.msra.mxu0 0
    %506 = vmatprep.subr.bf16.mxu0 0
    %507 = vmatpush1.bf16.xpose.msra.mxu0 0
    %508 = vmatprep.subr.bf16.mxu0 0
    %509 = vmatpush1.bf16.xpose.msra.mxu0 0
    %510 = vmatprep.subr.bf16.mxu0 0
    %511 = vmatpush1.bf16.xpose.msra.mxu0 0
    %512 = vmatprep.mubr.bf16.mxu0 0
    %513 = vmatmul.mubr.bf16.gmra.mrb[0].mxu0 %v475
    %v514 = vpop.f32.mrb[0].mxu0
    %v515 = vadd.f32 %v196, %v514
    %v516 = vpop.f32.mrb[0].mxu0
    %v517 = vpop.f32.mrb[0].mxu0
    %v518 = vpop.f32.mrb[0].mxu0
    %519 = vdwg.mxu0
    %v520 = vsel %vm298, %v465, -inf
    %521 = vmax.xlane.f32.xlu0 %v520
    %v522 = vpop.xlane.xlu0 %521
    %v523 = vsel %vm298, %v515, -inf
    %524 = vmax.xlane.f32.xlu0 %v523
    %v525 = vpop.xlane.xlu0 %524
    %v526 = vsub.f32 %v465, %v522
    %v527 = vsub.f32 %v515, %v525
    %v528 = vmul.f32 %v526, 1.442695
    %v529 = vpow.pop %v528
    %v530 = vmul.f32 %v527, 1.442695
    %v531 = vpow.pop %v530
    %v532 = vsel %vm298, %v529, 0.0
    %533 = vadd.xlane.f32.xlu0 %v532
    %v534 = vpop.xlane.xlu0 %533
    %v535 = vsel %vm298, %v531, 0.0
    %536 = vadd.xlane.f32.xlu0 %v535
    %v537 = vpop.xlane.xlu0 %536
    %v538 = vpack.c.bf16 %v529, %v529
    %v539 = vpack.c.bf16 %v531, %v531
    %540 = vrot.lane.b32.xlu0 %v185, 48
    %v541 = vpop.permute.xlu0 %540
    %v543 = vsel %vm298, %v538, 0
    %v546 = vsel %vm324, %v541, 0
    %548 = vmatprep.subr.bf16.mxu0 0
    %549 = vmatpush1.bf16.msra.mxu0 %v546
    %550 = vmatprep.subr.bf16.mxu0 0
    %551 = vmatpush1.bf16.msra.mxu0 0
    %552 = vmatprep.subr.bf16.mxu0 0
    %553 = vmatpush1.bf16.msra.mxu0 0
    %554 = vmatprep.subr.bf16.mxu0 0
    %555 = vmatpush1.bf16.msra.mxu0 0
    %556 = vmatprep.subr.bf16.mxu0 0
    %557 = vmatpush1.bf16.msra.mxu0 0
    %558 = vmatprep.subr.bf16.mxu0 0
    %559 = vmatpush1.bf16.msra.mxu0 0
    %560 = vmatprep.subr.bf16.mxu0 0
    %561 = vmatpush1.bf16.msra.mxu0 0
    %562 = vmatprep.subr.bf16.mxu0 0
    %563 = vmatpush1.bf16.msra.mxu0 0
    %564 = vmatprep.subr.bf16.mxu0 0
    %565 = vmatpush1.bf16.msra.mxu0 0
    %566 = vmatprep.subr.bf16.mxu0 0
    %567 = vmatpush1.bf16.msra.mxu0 0
    %568 = vmatprep.subr.bf16.mxu0 0
    %569 = vmatpush1.bf16.msra.mxu0 0
    %570 = vmatprep.subr.bf16.mxu0 0
    %571 = vmatpush1.bf16.msra.mxu0 0
    %572 = vmatprep.subr.bf16.mxu0 0
    %573 = vmatpush1.bf16.msra.mxu0 0
    %574 = vmatprep.subr.bf16.mxu0 0
    %575 = vmatpush1.bf16.msra.mxu0 0
    %576 = vmatprep.subr.bf16.mxu0 0
    %577 = vmatpush1.bf16.msra.mxu0 0
    %578 = vmatprep.subr.bf16.mxu0 0
    %579 = vmatpush1.bf16.msra.mxu0 0
    %580 = vmatprep.mubr.bf16.mxu0 0
    %581 = vmatmul.mubr.bf16.gmra.mrb[0].mxu0 %v543
    %v582 = vpop.f32.mrb[0].mxu0
    %v583 = vadd.f32 0.0, %v582
    %v584 = vpop.f32.mrb[0].mxu0
    %v585 = vpop.f32.mrb[0].mxu0
    %v586 = vpop.f32.mrb[0].mxu0
    %587 = vdwg.mxu0
    %588 = vrot.lane.b32.xlu0 %v186, 48
    %v589 = vpop.permute.xlu0 %588
    %v591 = vsel %vm298, %v539, 0
    %v594 = vsel %vm324, %v589, 0
    %596 = vmatprep.subr.bf16.mxu0 0
    %597 = vmatpush1.bf16.msra.mxu0 %v594
    %598 = vmatprep.subr.bf16.mxu0 0
    %599 = vmatpush1.bf16.msra.mxu0 0
    %600 = vmatprep.subr.bf16.mxu0 0
    %601 = vmatpush1.bf16.msra.mxu0 0
    %602 = vmatprep.subr.bf16.mxu0 0
    %603 = vmatpush1.bf16.msra.mxu0 0
    %604 = vmatprep.subr.bf16.mxu0 0
    %605 = vmatpush1.bf16.msra.mxu0 0
    %606 = vmatprep.subr.bf16.mxu0 0
    %607 = vmatpush1.bf16.msra.mxu0 0
    %608 = vmatprep.subr.bf16.mxu0 0
    %609 = vmatpush1.bf16.msra.mxu0 0
    %610 = vmatprep.subr.bf16.mxu0 0
    %611 = vmatpush1.bf16.msra.mxu0 0
    %612 = vmatprep.subr.bf16.mxu0 0
    %613 = vmatpush1.bf16.msra.mxu0 0
    %614 = vmatprep.subr.bf16.mxu0 0
    %615 = vmatpush1.bf16.msra.mxu0 0
    %616 = vmatprep.subr.bf16.mxu0 0
    %617 = vmatpush1.bf16.msra.mxu0 0
    %618 = vmatprep.subr.bf16.mxu0 0
    %619 = vmatpush1.bf16.msra.mxu0 0
    %620 = vmatprep.subr.bf16.mxu0 0
    %621 = vmatpush1.bf16.msra.mxu0 0
    %622 = vmatprep.subr.bf16.mxu0 0
    %623 = vmatpush1.bf16.msra.mxu0 0
    %624 = vmatprep.subr.bf16.mxu0 0
    %625 = vmatpush1.bf16.msra.mxu0 0
    %626 = vmatprep.subr.bf16.mxu0 0
    %627 = vmatpush1.bf16.msra.mxu0 0
    %628 = vmatprep.mubr.bf16.mxu0 0
    %629 = vmatmul.mubr.bf16.gmra.mrb[0].mxu0 %v591
    %v630 = vpop.f32.mrb[0].mxu0
    %v631 = vadd.f32 0.0, %v630
    %v632 = vpop.f32.mrb[0].mxu0
    %v633 = vpop.f32.mrb[0].mxu0
    %v634 = vpop.f32.mrb[0].mxu0
    %635 = vdwg.mxu0
    %v636 = vrcp.pop %v534
    %v637 = vrcp.pop %v537
    %v638 = vmul.f32 %v583, %v636
    %v639 = vmul.f32 %v631, %v637
    %642 = vrot.lane.b32.xlu0 %v638, 16
    %v643 = vpop.permute.xlu0 %642
    %644 = vrot.lane.b32.xlu0 %v639, 16
    %v645 = vpop.permute.xlu0 %644
    %v648 = vsel %vm202, %v418, %v643
    %v649 = vsel %vm202, %v419, %v645
    %v650 = vpack.c.bf16 %v649, %v648
    %v651 = vld [vmem:[%s6] sm:$0xf]
    %v652 = vld [vmem:[%s6 + $0x4] sm:$0xf]
    %v653 = vld [vmem:[%s6 + $0x8] sm:$0xf]
    %v654 = vld [vmem:[%s6 + $0xc] sm:$0xf]
    %v655 = vld [vmem:[%s7] sm:$0x1]
    %v657 = vlaneseq
    %v658 = vshrl.u32 %v657, 7
    %v659 = vsub.s32 0, %v658
    %v660 = vrot.slane %v655, %v659
    %v666 = vunpack.c.l.b16 %v651
    %v667 = vunpack.c.l.b16 %v652
    %v668 = vunpack.c.l.b16 %v653
    %v669 = vunpack.c.l.b16 %v654
    %v670 = vpack.c.b16 %v667, %v666
    %v671 = vpack.c.b16 %v669, %v668
    %v675 = vsel %vm71, %v650, 0
    %677 = vmatprep.subr.bf16.mxu0 0
    %678 = vmatpush1.bf16.msra.mxu0 %v670
    %679 = vmatprep.subr.bf16.mxu0 0
    %680 = vmatpush1.bf16.msra.mxu0 %v671
    %681 = vmatprep.subr.bf16.mxu0 0
    %682 = vmatpush1.bf16.msra.mxu0 0
    %683 = vmatprep.subr.bf16.mxu0 0
    %684 = vmatpush1.bf16.msra.mxu0 0
    %685 = vmatprep.subr.bf16.mxu0 0
    %686 = vmatpush1.bf16.msra.mxu0 0
    %687 = vmatprep.subr.bf16.mxu0 0
    %688 = vmatpush1.bf16.msra.mxu0 0
    %689 = vmatprep.subr.bf16.mxu0 0
    %690 = vmatpush1.bf16.msra.mxu0 0
    %691 = vmatprep.subr.bf16.mxu0 0
    %692 = vmatpush1.bf16.msra.mxu0 0
    %693 = vmatprep.subr.bf16.mxu0 0
    %694 = vmatpush1.bf16.msra.mxu0 0
    %695 = vmatprep.subr.bf16.mxu0 0
    %696 = vmatpush1.bf16.msra.mxu0 0
    %697 = vmatprep.subr.bf16.mxu0 0
    %698 = vmatpush1.bf16.msra.mxu0 0
    %699 = vmatprep.subr.bf16.mxu0 0
    %700 = vmatpush1.bf16.msra.mxu0 0
    %701 = vmatprep.subr.bf16.mxu0 0
    %702 = vmatpush1.bf16.msra.mxu0 0
    %703 = vmatprep.subr.bf16.mxu0 0
    %704 = vmatpush1.bf16.msra.mxu0 0
    %705 = vmatprep.subr.bf16.mxu0 0
    %706 = vmatpush1.bf16.msra.mxu0 0
    %707 = vmatprep.subr.bf16.mxu0 0
    %708 = vmatpush1.bf16.msra.mxu0 0
    %709 = vmatprep.mubr.bf16.mxu0 0
    %710 = vmatmul.mubr.bf16.gmra.mrb[0].mxu0 %v675
    %v711 = vpop.f32.mrb[0].mxu0
    %v712 = vadd.f32 %v660, %v711
    %v713 = vpop.f32.mrb[0].mxu0
    %v714 = vpop.f32.mrb[0].mxu0
    %v715 = vadd.f32 %v660, %v714
    %v716 = vpop.f32.mrb[0].mxu0
    %717 = vdwg.mxu0
    %v718 = vadd.f32 %v712, %v113
    %v719 = vadd.f32 %v715, %v114
    %v720 = vld [vmem:[%s8] sm:$0x1]
    %v721 = vld [vmem:[%s9] sm:$0x1]
    %v722 = vsel %vm71, %v718, 0.0
    %723 = vadd.xlane.f32.xlu0 %v722
    %v724 = vpop.xlane.xlu0 %723
    %v725 = vsel %vm71, %v719, 0.0
    %726 = vadd.xlane.f32.xlu0 %v725
    %v727 = vpop.xlane.xlu0 %726
    %v728 = vmul.f32 %v724, %v78
    %v729 = vmul.f32 %v727, %v78
    %v730 = vsub.f32 %v718, %v728
    %v731 = vsub.f32 %v719, %v729
    %v732 = vmul.f32 %v730, %v730
    %v733 = vmul.f32 %v731, %v731
    %v734 = vsel %vm71, %v732, 0.0
    %735 = vadd.xlane.f32.xlu0 %v734
    %v736 = vpop.xlane.xlu0 %735
    %v737 = vsel %vm71, %v733, 0.0
    %738 = vadd.xlane.f32.xlu0 %v737
    %v739 = vpop.xlane.xlu0 %738
    %v740 = vmul.f32 %v736, %v78
    %v741 = vmul.f32 %v739, %v78
    %v742 = vadd.f32 %v740, 1e-12
    %v743 = vadd.f32 %v741, 1e-12
    %v744 = vrsqrt.pop %v742
    %v745 = vrsqrt.pop %v743
    %v746 = vmul.f32 %v730, %v744
    %v747 = vmul.f32 %v731, %v745
    %v749 = vlaneseq
    %v750 = vshrl.u32 %v749, 7
    %v751 = vsub.s32 0, %v750
    %v752 = vrot.slane %v720, %v751
    %v754 = vmul.f32 %v746, %v752
    %v755 = vmul.f32 %v747, %v752
    %v757 = vlaneseq
    %v758 = vshrl.u32 %v757, 7
    %v759 = vsub.s32 0, %v758
    %v760 = vrot.slane %v721, %v759
    %v762 = vadd.f32 %v754, %v760
    %v763 = vadd.f32 %v755, %v760
    %v764 = vpack.c.bf16 %v763, %v762
    %v765 = vld [vmem:[%s10] sm:$0xf]
    %v766 = vld [vmem:[%s10 + $0x4] sm:$0xf]
    %v767 = vld [vmem:[%s10 + $0x8] sm:$0xf]
    %v768 = vld [vmem:[%s10 + $0xc] sm:$0xf]
    %v769 = vld [vmem:[%s11] sm:$0x1]
    %v771 = vlaneseq
    %v772 = vshrl.u32 %v771, 7
    %v773 = vsub.s32 0, %v772
    %v774 = vrot.slane %v769, %v773
    %v780 = vunpack.c.l.b16 %v765
    %v781 = vunpack.c.l.b16 %v766
    %v782 = vunpack.c.l.b16 %v767
    %v783 = vunpack.c.l.b16 %v768
    %v784 = vpack.c.b16 %v781, %v780
    %v785 = vpack.c.b16 %v783, %v782
    %v789 = vsel %vm71, %v764, 0
    %791 = vmatprep.subr.bf16.mxu0 0
    %792 = vmatpush1.bf16.msra.mxu0 %v784
    %793 = vmatprep.subr.bf16.mxu0 0
    %794 = vmatpush1.bf16.msra.mxu0 %v785
    %795 = vmatprep.subr.bf16.mxu0 0
    %796 = vmatpush1.bf16.msra.mxu0 0
    %797 = vmatprep.subr.bf16.mxu0 0
    %798 = vmatpush1.bf16.msra.mxu0 0
    %799 = vmatprep.subr.bf16.mxu0 0
    %800 = vmatpush1.bf16.msra.mxu0 0
    %801 = vmatprep.subr.bf16.mxu0 0
    %802 = vmatpush1.bf16.msra.mxu0 0
    %803 = vmatprep.subr.bf16.mxu0 0
    %804 = vmatpush1.bf16.msra.mxu0 0
    %805 = vmatprep.subr.bf16.mxu0 0
    %806 = vmatpush1.bf16.msra.mxu0 0
    %807 = vmatprep.subr.bf16.mxu0 0
    %808 = vmatpush1.bf16.msra.mxu0 0
    %809 = vmatprep.subr.bf16.mxu0 0
    %810 = vmatpush1.bf16.msra.mxu0 0
    %811 = vmatprep.subr.bf16.mxu0 0
    %812 = vmatpush1.bf16.msra.mxu0 0
    %813 = vmatprep.subr.bf16.mxu0 0
    %814 = vmatpush1.bf16.msra.mxu0 0
    %815 = vmatprep.subr.bf16.mxu0 0
    %816 = vmatpush1.bf16.msra.mxu0 0
    %817 = vmatprep.subr.bf16.mxu0 0
    %818 = vmatpush1.bf16.msra.mxu0 0
    %819 = vmatprep.subr.bf16.mxu0 0
    %820 = vmatpush1.bf16.msra.mxu0 0
    %821 = vmatprep.subr.bf16.mxu0 0
    %822 = vmatpush1.bf16.msra.mxu0 0
    %823 = vmatprep.mubr.bf16.mxu0 0
    %824 = vmatmul.mubr.bf16.gmra.mrb[0].mxu0 %v789
    %v825 = vpop.f32.mrb[0].mxu0
    %v826 = vadd.f32 %v774, %v825
    %v827 = vpop.f32.mrb[0].mxu0
    %v828 = vpop.f32.mrb[0].mxu0
    %v829 = vadd.f32 %v774, %v828
    %v830 = vpop.f32.mrb[0].mxu0
    %831 = vdwg.mxu0
    %v832 = vmul.f32 %v826, %v826
    %v833 = vmul.f32 %v829, %v829
    %v834 = vmul.f32 %v826, %v832
    %v835 = vmul.f32 %v829, %v833
    %v836 = vmul.f32 %v834, 0.044715
    %v837 = vmul.f32 %v835, 0.044715
    %v838 = vadd.f32 %v826, %v836
    %v839 = vadd.f32 %v829, %v837
    %v840 = vmul.f32 %v838, 0.7978846
    %v841 = vmul.f32 %v839, 0.7978846
    %v842 = vtanh.pop %v840
    %v843 = vtanh.pop %v841
    %v844 = vadd.f32 %v842, 1.0
    %v845 = vadd.f32 %v843, 1.0
    %v846 = vmul.f32 %v844, 0.5
    %v847 = vmul.f32 %v845, 0.5
    %v848 = vmul.f32 %v826, %v846
    %v849 = vmul.f32 %v829, %v847
    %v850 = vpack.c.bf16 %v849, %v848
    %v851 = vld [vmem:[%s12] sm:$0xf]
    %v852 = vld [vmem:[%s12 + $0x4] sm:$0xf]
    %v853 = vld [vmem:[%s12 + $0x8] sm:$0xf]
    %v854 = vld [vmem:[%s12 + $0xc] sm:$0xf]
    %v855 = vld [vmem:[%s12 + $0x10] sm:$0xf]
    %v856 = vld [vmem:[%s12 + $0x14] sm:$0xf]
    %v857 = vld [vmem:[%s12 + $0x18] sm:$0xf]
    %v858 = vld [vmem:[%s12 + $0x1c] sm:$0xf]
    %v859 = vld [vmem:[%s13] sm:$0x1]
    %v861 = vlaneseq
    %v862 = vshrl.u32 %v861, 7
    %v863 = vsub.s32 0, %v862
    %v864 = vrot.slane %v859, %v863
    %v874 = vunpack.c.l.b16 %v851
    %v875 = vunpack.c.l.b16 %v852
    %v876 = vunpack.c.l.b16 %v853
    %v877 = vunpack.c.l.b16 %v854
    %v878 = vunpack.c.l.b16 %v855
    %v879 = vunpack.c.l.b16 %v856
    %v880 = vunpack.c.l.b16 %v857
    %v881 = vunpack.c.l.b16 %v858
    %v882 = vpack.c.b16 %v875, %v874
    %v883 = vpack.c.b16 %v877, %v876
    %v884 = vpack.c.b16 %v879, %v878
    %v885 = vpack.c.b16 %v881, %v880
    %vm890 = vcmask 523264
    %v892 = vsel %vm890, %v850, 0
    %894 = vmatprep.subr.bf16.mxu0 0
    %895 = vmatpush1.bf16.msra.mxu0 %v882
    %896 = vmatprep.subr.bf16.mxu0 0
    %897 = vmatpush1.bf16.msra.mxu0 %v883
    %898 = vmatprep.subr.bf16.mxu0 0
    %899 = vmatpush1.bf16.msra.mxu0 %v884
    %900 = vmatprep.subr.bf16.mxu0 0
    %901 = vmatpush1.bf16.msra.mxu0 %v885
    %902 = vmatprep.subr.bf16.mxu0 0
    %903 = vmatpush1.bf16.msra.mxu0 0
    %904 = vmatprep.subr.bf16.mxu0 0
    %905 = vmatpush1.bf16.msra.mxu0 0
    %906 = vmatprep.subr.bf16.mxu0 0
    %907 = vmatpush1.bf16.msra.mxu0 0
    %908 = vmatprep.subr.bf16.mxu0 0
    %909 = vmatpush1.bf16.msra.mxu0 0
    %910 = vmatprep.subr.bf16.mxu0 0
    %911 = vmatpush1.bf16.msra.mxu0 0
    %912 = vmatprep.subr.bf16.mxu0 0
    %913 = vmatpush1.bf16.msra.mxu0 0
    %914 = vmatprep.subr.bf16.mxu0 0
    %915 = vmatpush1.bf16.msra.mxu0 0
    %916 = vmatprep.subr.bf16.mxu0 0
    %917 = vmatpush1.bf16.msra.mxu0 0
    %918 = vmatprep.subr.bf16.mxu0 0
    %919 = vmatpush1.bf16.msra.mxu0 0
    %920 = vmatprep.subr.bf16.mxu0 0
    %921 = vmatpush1.bf16.msra.mxu0 0
    %922 = vmatprep.subr.bf16.mxu0 0
    %923 = vmatpush1.bf16.msra.mxu0 0
    %924 = vmatprep.subr.bf16.mxu0 0
    %925 = vmatpush1.bf16.msra.mxu0 0
    %926 = vmatprep.mubr.bf16.mxu0 0
    %927 = vmatmul.mubr.bf16.gmra.mrb[0].mxu0 %v892
    %v928 = vpop.f32.mrb[0].mxu0
    %v929 = vadd.f32 %v864, %v928
    %v930 = vpop.f32.mrb[0].mxu0
    %v931 = vpop.f32.mrb[0].mxu0
    %v932 = vadd.f32 %v864, %v931
    %v933 = vpop.f32.mrb[0].mxu0
    %934 = vdwg.mxu0
    %v935 = vadd.f32 %v929, %v762
    %v936 = vadd.f32 %v932, %v763
    %v937 = vld [vmem:[%s14] sm:$0x1]
    %v938 = vld [vmem:[%s15] sm:$0x1]
    %v939 = vsel %vm71, %v935, 0.0
    %940 = vadd.xlane.f32.xlu0 %v939
    %v941 = vpop.xlane.xlu0 %940
    %v942 = vsel %vm71, %v936, 0.0
    %943 = vadd.xlane.f32.xlu0 %v942
    %v944 = vpop.xlane.xlu0 %943
    %v945 = vmul.f32 %v941, %v78
    %v946 = vmul.f32 %v944, %v78
    %v947 = vsub.f32 %v935, %v945
    %v948 = vsub.f32 %v936, %v946
    %v949 = vmul.f32 %v947, %v947
    %v950 = vmul.f32 %v948, %v948
    %v951 = vsel %vm71, %v949, 0.0
    %952 = vadd.xlane.f32.xlu0 %v951
    %v953 = vpop.xlane.xlu0 %952
    %v954 = vsel %vm71, %v950, 0.0
    %955 = vadd.xlane.f32.xlu0 %v954
    %v956 = vpop.xlane.xlu0 %955
    %v957 = vmul.f32 %v953, %v78
    %v958 = vmul.f32 %v956, %v78
    %v959 = vadd.f32 %v957, 1e-12
    %v960 = vadd.f32 %v958, 1e-12
    %v961 = vrsqrt.pop %v959
    %v962 = vrsqrt.pop %v960
    %v963 = vmul.f32 %v947, %v961
    %v964 = vmul.f32 %v948, %v962
    %v966 = vlaneseq
    %v967 = vshrl.u32 %v966, 7
    %v968 = vsub.s32 0, %v967
    %v969 = vrot.slane %v937, %v968
    %v971 = vmul.f32 %v963, %v969
    %v972 = vmul.f32 %v964, %v969
    %v974 = vlaneseq
    %v975 = vshrl.u32 %v974, 7
    %v976 = vsub.s32 0, %v975
    %v977 = vrot.slane %v938, %v976
    %v979 = vadd.f32 %v971, %v977
    %v980 = vadd.f32 %v972, %v977
    %v981 = vpack.c.bf16 %v980, %v979
    %s982 = scalar_lea.vmem %s4, 16
    %v983 = vld [vmem:[%s982] sm:$0xf]
    %v984 = vld [vmem:[%s982 + $0x4] sm:$0xf]
    %v985 = vld [vmem:[%s982 + $0x8] sm:$0xf]
    %v986 = vld [vmem:[%s982 + $0xc] sm:$0xf]
    %s987 = scalar_lea.vmem %s5, 1
    %v988 = vld [vmem:[%s987] sm:$0x1]
    %v990 = vlaneseq
    %v991 = vshrl.u32 %v990, 7
    %v992 = vsub.s32 0, %v991
    %v993 = vrot.slane %v988, %v992
    %v999 = vunpack.c.l.b16 %v983
    %v1000 = vunpack.c.l.b16 %v984
    %v1001 = vunpack.c.l.b16 %v985
    %v1002 = vunpack.c.l.b16 %v986
    %v1003 = vpack.c.b16 %v1000, %v999
    %v1004 = vpack.c.b16 %v1002, %v1001
    %v1008 = vsel %vm71, %v981, 0
    %1010 = vmatprep.subr.bf16.mxu0 0
    %1011 = vmatpush1.bf16.msra.mxu0 %v1003
    %1012 = vmatprep.subr.bf16.mxu0 0
    %1013 = vmatpush1.bf16.msra.mxu0 %v1004
    %1014 = vmatprep.subr.bf16.mxu0 0
    %1015 = vmatpush1.bf16.msra.mxu0 0
    %1016 = vmatprep.subr.bf16.mxu0 0
    %1017 = vmatpush1.bf16.msra.mxu0 0
    %1018 = vmatprep.subr.bf16.mxu0 0
    %1019 = vmatpush1.bf16.msra.mxu0 0
    %1020 = vmatprep.subr.bf16.mxu0 0
    %1021 = vmatpush1.bf16.msra.mxu0 0
    %1022 = vmatprep.subr.bf16.mxu0 0
    %1023 = vmatpush1.bf16.msra.mxu0 0
    %1024 = vmatprep.subr.bf16.mxu0 0
    %1025 = vmatpush1.bf16.msra.mxu0 0
    %1026 = vmatprep.subr.bf16.mxu0 0
    %1027 = vmatpush1.bf16.msra.mxu0 0
    %1028 = vmatprep.subr.bf16.mxu0 0
    %1029 = vmatpush1.bf16.msra.mxu0 0
    %1030 = vmatprep.subr.bf16.mxu0 0
    %1031 = vmatpush1.bf16.msra.mxu0 0
    %1032 = vmatprep.subr.bf16.mxu0 0
    %1033 = vmatpush1.bf16.msra.mxu0 0
    %1034 = vmatprep.subr.bf16.mxu0 0
    %1035 = vmatpush1.bf16.msra.mxu0 0
    %1036 = vmatprep.subr.bf16.mxu0 0
    %1037 = vmatpush1.bf16.msra.mxu0 0
    %1038 = vmatprep.subr.bf16.mxu0 0
    %1039 = vmatpush1.bf16.msra.mxu0 0
    %1040 = vmatprep.subr.bf16.mxu0 0
    %1041 = vmatpush1.bf16.msra.mxu0 0
    %1042 = vmatprep.mubr.bf16.mxu0 0
    %1043 = vmatmul.mubr.bf16.gmra.mrb[0].mxu0 %v1008
    %v1044 = vpop.f32.mrb[0].mxu0
    %v1045 = vadd.f32 %v993, %v1044
    %v1046 = vpop.f32.mrb[0].mxu0
    %v1047 = vpop.f32.mrb[0].mxu0
    %v1048 = vadd.f32 %v993, %v1047
    %v1049 = vpop.f32.mrb[0].mxu0
    %1050 = vdwg.mxu0
    %v1051 = vpack.c.bf16 %v1045, %v1045
    %v1052 = vpack.c.bf16 %v1048, %v1048
    %1054 = vrot.lane.b32.xlu0 %v1051, 96
    %v1055 = vpop.permute.xlu0 %1054
    %v1057 = vsel %vm202, %v1051, 0
    %v1060 = vsel %vm202, %v1055, 0
    %1062 = vmatprep.subr.bf16.mxu0 0
    %1063 = vmatpush1.bf16.xpose.msra.mxu0 %v1060
    %1064 = vmatprep.subr.bf16.mxu0 0
    %1065 = vmatpush1.bf16.xpose.msra.mxu0 0
    %1066 = vmatprep.subr.bf16.mxu0 0
    %1067 = vmatpush1.bf16.xpose.msra.mxu0 0
    %1068 = vmatprep.subr.bf16.mxu0 0
    %1069 = vmatpush1.bf16.xpose.msra.mxu0 0
    %1070 = vmatprep.subr.bf16.mxu0 0
    %1071 = vmatpush1.bf16.xpose.msra.mxu0 0
    %1072 = vmatprep.subr.bf16.mxu0 0
    %1073 = vmatpush1.bf16.xpose.msra.mxu0 0
    %1074 = vmatprep.subr.bf16.mxu0 0
    %1075 = vmatpush1.bf16.xpose.msra.mxu0 0
    %1076 = vmatprep.subr.bf16.mxu0 0
    %1077 = vmatpush1.bf16.xpose.msra.mxu0 0
    %1078 = vmatprep.subr.bf16.mxu0 0
    %1079 = vmatpush1.bf16.xpose.msra.mxu0 0
    %1080 = vmatprep.subr.bf16.mxu0 0
    %1081 = vmatpush1.bf16.xpose.msra.mxu0 0
    %1082 = vmatprep.subr.bf16.mxu0 0
    %1083 = vmatpush1.bf16.xpose.msra.mxu0 0
    %1084 = vmatprep.subr.bf16.mxu0 0
    %1085 = vmatpush1.bf16.xpose.msra.mxu0 0
    %1086 = vmatprep.subr.bf16.mxu0 0
    %1087 = vmatpush1.bf16.xpose.msra.mxu0 0
    %1088 = vmatprep.subr.bf16.mxu0 0
    %1089 = vmatpush1.bf16.xpose.msra.mxu0 0
    %1090 = vmatprep.subr.bf16.mxu0 0
    %1091 = vmatpush1.bf16.xpose.msra.mxu0 0
    %1092 = vmatprep.subr.bf16.mxu0 0
    %1093 = vmatpush1.bf16.xpose.msra.mxu0 0
    %1094 = vmatprep.mubr.bf16.mxu0 0
    %1095 = vmatmul.mubr.bf16.gmra.mrb[0].mxu0 %v1057
    %v1096 = vpop.f32.mrb[0].mxu0
    %v1097 = vadd.f32 %v192, %v1096
    %v1098 = vpop.f32.mrb[0].mxu0
    %v1099 = vpop.f32.mrb[0].mxu0
    %v1100 = vpop.f32.mrb[0].mxu0
    %1101 = vdwg.mxu0
    %1103 = vrot.lane.b32.xlu0 %v1052, 96
    %v1104 = vpop.permute.xlu0 %1103
    %v1106 = vsel %vm202, %v1052, 0
    %v1109 = vsel %vm202, %v1104, 0
    %1111 = vmatprep.subr.bf16.mxu0 0
    %1112 = vmatpush1.bf16.xpose.msra.mxu0 %v1109
    %1113 = vmatprep.subr.bf16.mxu0 0
    %1114 = vmatpush1.bf16.xpose.msra.mxu0 0
    %1115 = vmatprep.subr.bf16.mxu0 0
    %1116 = vmatpush1.bf16.xpose.msra.mxu0 0
    %1117 = vmatprep.subr.bf16.mxu0 0
    %1118 = vmatpush1.bf16.xpose.msra.mxu0 0
    %1119 = vmatprep.subr.bf16.mxu0 0
    %1120 = vmatpush1.bf16.xpose.msra.mxu0 0
    %1121 = vmatprep.subr.bf16.mxu0 0
    %1122 = vmatpush1.bf16.xpose.msra.mxu0 0
    %1123 = vmatprep.subr.bf16.mxu0 0
    %1124 = vmatpush1.bf16.xpose.msra.mxu0 0
    %1125 = vmatprep.subr.bf16.mxu0 0
    %1126 = vmatpush1.bf16.xpose.msra.mxu0 0
    %1127 = vmatprep.subr.bf16.mxu0 0
    %1128 = vmatpush1.bf16.xpose.msra.mxu0 0
    %1129 = vmatprep.subr.bf16.mxu0 0
    %1130 = vmatpush1.bf16.xpose.msra.mxu0 0
    %1131 = vmatprep.subr.bf16.mxu0 0
    %1132 = vmatpush1.bf16.xpose.msra.mxu0 0
    %1133 = vmatprep.subr.bf16.mxu0 0
    %1134 = vmatpush1.bf16.xpose.msra.mxu0 0
    %1135 = vmatprep.subr.bf16.mxu0 0
    %1136 = vmatpush1.bf16.xpose.msra.mxu0 0
    %1137 = vmatprep.subr.bf16.mxu0 0
    %1138 = vmatpush1.bf16.xpose.msra.mxu0 0
    %1139 = vmatprep.subr.bf16.mxu0 0
    %1140 = vmatpush1.bf16.xpose.msra.mxu0 0
    %1141 = vmatprep.subr.bf16.mxu0 0
    %1142 = vmatpush1.bf16.xpose.msra.mxu0 0
    %1143 = vmatprep.mubr.bf16.mxu0 0
    %1144 = vmatmul.mubr.bf16.gmra.mrb[0].mxu0 %v1106
    %v1145 = vpop.f32.mrb[0].mxu0
    %v1146 = vadd.f32 %v196, %v1145
    %v1147 = vpop.f32.mrb[0].mxu0
    %v1148 = vpop.f32.mrb[0].mxu0
    %v1149 = vpop.f32.mrb[0].mxu0
    %1150 = vdwg.mxu0
    %v1151 = vsel %vm298, %v1097, -inf
    %1152 = vmax.xlane.f32.xlu0 %v1151
    %v1153 = vpop.xlane.xlu0 %1152
    %v1154 = vsel %vm298, %v1146, -inf
    %1155 = vmax.xlane.f32.xlu0 %v1154
    %v1156 = vpop.xlane.xlu0 %1155
    %v1157 = vsub.f32 %v1097, %v1153
    %v1158 = vsub.f32 %v1146, %v1156
    %v1159 = vmul.f32 %v1157, 1.442695
    %v1160 = vpow.pop %v1159
    %v1161 = vmul.f32 %v1158, 1.442695
    %v1162 = vpow.pop %v1161
    %v1163 = vsel %vm298, %v1160, 0.0
    %1164 = vadd.xlane.f32.xlu0 %v1163
    %v1165 = vpop.xlane.xlu0 %1164
    %v1166 = vsel %vm298, %v1162, 0.0
    %1167 = vadd.xlane.f32.xlu0 %v1166
    %v1168 = vpop.xlane.xlu0 %1167
    %v1169 = vpack.c.bf16 %v1160, %v1160
    %v1170 = vpack.c.bf16 %v1162, %v1162
    %1171 = vrot.lane.b32.xlu0 %v1051, 64
    %v1172 = vpop.permute.xlu0 %1171
    %v1174 = vsel %vm298, %v1169, 0
    %v1177 = vsel %vm324, %v1172, 0
    %1179 = vmatprep.subr.bf16.mxu0 0
    %1180 = vmatpush1.bf16.msra.mxu0 %v1177
    %1181 = vmatprep.subr.bf16.mxu0 0
    %1182 = vmatpush1.bf16.msra.mxu0 0
    %1183 = vmatprep.subr.bf16.mxu0 0
    %1184 = vmatpush1.bf16.msra.mxu0 0
    %1185 = vmatprep.subr.bf16.mxu0 0
    %1186 = vmatpush1.bf16.msra.mxu0 0
    %1187 = vmatprep.subr.bf16.mxu0 0
    %1188 = vmatpush1.bf16.msra.mxu0 0
    %1189 = vmatprep.subr.bf16.mxu0 0
    %1190 = vmatpush1.bf16.msra.mxu0 0
    %1191 = vmatprep.subr.bf16.mxu0 0
    %1192 = vmatpush1.bf16.msra.mxu0 0
    %1193 = vmatprep.subr.bf16.mxu0 0
    %1194 = vmatpush1.bf16.msra.mxu0 0
    %1195 = vmatprep.subr.bf16.mxu0 0
    %1196 = vmatpush1.bf16.msra.mxu0 0
    %1197 = vmatprep.subr.bf16.mxu0 0
    %1198 = vmatpush1.bf16.msra.mxu0 0
    %1199 = vmatprep.subr.bf16.mxu0 0
    %1200 = vmatpush1.bf16.msra.mxu0 0
    %1201 = vmatprep.subr.bf16.mxu0 0
    %1202 = vmatpush1.bf16.msra.mxu0 0
    %1203 = vmatprep.subr.bf16.mxu0 0
    %1204 = vmatpush1.bf16.msra.mxu0 0
    %1205 = vmatprep.subr.bf16.mxu0 0
    %1206 = vmatpush1.bf16.msra.mxu0 0
    %1207 = vmatprep.subr.bf16.mxu0 0
    %1208 = vmatpush1.bf16.msra.mxu0 0
    %1209 = vmatprep.subr.bf16.mxu0 0
    %1210 = vmatpush1.bf16.msra.mxu0 0
    %1211 = vmatprep.mubr.bf16.mxu0 0
    %1212 = vmatmul.mubr.bf16.gmra.mrb[0].mxu0 %v1174
    %v1213 = vpop.f32.mrb[0].mxu0
    %v1214 = vadd.f32 0.0, %v1213
    %v1215 = vpop.f32.mrb[0].mxu0
    %v1216 = vpop.f32.mrb[0].mxu0
    %v1217 = vpop.f32.mrb[0].mxu0
    %1218 = vdwg.mxu0
    %1219 = vrot.lane.b32.xlu0 %v1052, 64
    %v1220 = vpop.permute.xlu0 %1219
    %v1222 = vsel %vm298, %v1170, 0
    %v1225 = vsel %vm324, %v1220, 0
    %1227 = vmatprep.subr.bf16.mxu0 0
    %1228 = vmatpush1.bf16.msra.mxu0 %v1225
    %1229 = vmatprep.subr.bf16.mxu0 0
    %1230 = vmatpush1.bf16.msra.mxu0 0
    %1231 = vmatprep.subr.bf16.mxu0 0
    %1232 = vmatpush1.bf16.msra.mxu0 0
    %1233 = vmatprep.subr.bf16.mxu0 0
    %1234 = vmatpush1.bf16.msra.mxu0 0
    %1235 = vmatprep.subr.bf16.mxu0 0
    %1236 = vmatpush1.bf16.msra.mxu0 0
    %1237 = vmatprep.subr.bf16.mxu0 0
    %1238 = vmatpush1.bf16.msra.mxu0 0
    %1239 = vmatprep.subr.bf16.mxu0 0
    %1240 = vmatpush1.bf16.msra.mxu0 0
    %1241 = vmatprep.subr.bf16.mxu0 0
    %1242 = vmatpush1.bf16.msra.mxu0 0
    %1243 = vmatprep.subr.bf16.mxu0 0
    %1244 = vmatpush1.bf16.msra.mxu0 0
    %1245 = vmatprep.subr.bf16.mxu0 0
    %1246 = vmatpush1.bf16.msra.mxu0 0
    %1247 = vmatprep.subr.bf16.mxu0 0
    %1248 = vmatpush1.bf16.msra.mxu0 0
    %1249 = vmatprep.subr.bf16.mxu0 0
    %1250 = vmatpush1.bf16.msra.mxu0 0
    %1251 = vmatprep.subr.bf16.mxu0 0
    %1252 = vmatpush1.bf16.msra.mxu0 0
    %1253 = vmatprep.subr.bf16.mxu0 0
    %1254 = vmatpush1.bf16.msra.mxu0 0
    %1255 = vmatprep.subr.bf16.mxu0 0
    %1256 = vmatpush1.bf16.msra.mxu0 0
    %1257 = vmatprep.subr.bf16.mxu0 0
    %1258 = vmatpush1.bf16.msra.mxu0 0
    %1259 = vmatprep.mubr.bf16.mxu0 0
    %1260 = vmatmul.mubr.bf16.gmra.mrb[0].mxu0 %v1222
    %v1261 = vpop.f32.mrb[0].mxu0
    %v1262 = vadd.f32 0.0, %v1261
    %v1263 = vpop.f32.mrb[0].mxu0
    %v1264 = vpop.f32.mrb[0].mxu0
    %v1265 = vpop.f32.mrb[0].mxu0
    %1266 = vdwg.mxu0
    %v1267 = vrcp.pop %v1165
    %v1268 = vrcp.pop %v1168
    %v1269 = vmul.f32 %v1214, %v1267
    %v1270 = vmul.f32 %v1262, %v1268
    %1271 = vrot.lane.b32.xlu0 %v1051, 112
    %v1272 = vpop.permute.xlu0 %1271
    %1273 = vrot.lane.b32.xlu0 %v1051, 80
    %v1274 = vpop.permute.xlu0 %1273
    %v1276 = vsel %vm202, %v1272, 0
    %v1279 = vsel %vm202, %v1274, 0
    %1281 = vmatprep.subr.bf16.mxu0 0
    %1282 = vmatpush1.bf16.xpose.msra.mxu0 %v1279
    %1283 = vmatprep.subr.bf16.mxu0 0
    %1284 = vmatpush1.bf16.xpose.msra.mxu0 0
    %1285 = vmatprep.subr.bf16.mxu0 0
    %1286 = vmatpush1.bf16.xpose.msra.mxu0 0
    %1287 = vmatprep.subr.bf16.mxu0 0
    %1288 = vmatpush1.bf16.xpose.msra.mxu0 0
    %1289 = vmatprep.subr.bf16.mxu0 0
    %1290 = vmatpush1.bf16.xpose.msra.mxu0 0
    %1291 = vmatprep.subr.bf16.mxu0 0
    %1292 = vmatpush1.bf16.xpose.msra.mxu0 0
    %1293 = vmatprep.subr.bf16.mxu0 0
    %1294 = vmatpush1.bf16.xpose.msra.mxu0 0
    %1295 = vmatprep.subr.bf16.mxu0 0
    %1296 = vmatpush1.bf16.xpose.msra.mxu0 0
    %1297 = vmatprep.subr.bf16.mxu0 0
    %1298 = vmatpush1.bf16.xpose.msra.mxu0 0
    %1299 = vmatprep.subr.bf16.mxu0 0
    %1300 = vmatpush1.bf16.xpose.msra.mxu0 0
    %1301 = vmatprep.subr.bf16.mxu0 0
    %1302 = vmatpush1.bf16.xpose.msra.mxu0 0
    %1303 = vmatprep.subr.bf16.mxu0 0
    %1304 = vmatpush1.bf16.xpose.msra.mxu0 0
    %1305 = vmatprep.subr.bf16.mxu0 0
    %1306 = vmatpush1.bf16.xpose.msra.mxu0 0
    %1307 = vmatprep.subr.bf16.mxu0 0
    %1308 = vmatpush1.bf16.xpose.msra.mxu0 0
    %1309 = vmatprep.subr.bf16.mxu0 0
    %1310 = vmatpush1.bf16.xpose.msra.mxu0 0
    %1311 = vmatprep.subr.bf16.mxu0 0
    %1312 = vmatpush1.bf16.xpose.msra.mxu0 0
    %1313 = vmatprep.mubr.bf16.mxu0 0
    %1314 = vmatmul.mubr.bf16.gmra.mrb[0].mxu0 %v1276
    %v1315 = vpop.f32.mrb[0].mxu0
    %v1316 = vadd.f32 %v192, %v1315
    %v1317 = vpop.f32.mrb[0].mxu0
    %v1318 = vpop.f32.mrb[0].mxu0
    %v1319 = vpop.f32.mrb[0].mxu0
    %1320 = vdwg.mxu0
    %1321 = vrot.lane.b32.xlu0 %v1052, 112
    %v1322 = vpop.permute.xlu0 %1321
    %1323 = vrot.lane.b32.xlu0 %v1052, 80
    %v1324 = vpop.permute.xlu0 %1323
    %v1326 = vsel %vm202, %v1322, 0
    %v1329 = vsel %vm202, %v1324, 0
    %1331 = vmatprep.subr.bf16.mxu0 0
    %1332 = vmatpush1.bf16.xpose.msra.mxu0 %v1329
    %1333 = vmatprep.subr.bf16.mxu0 0
    %1334 = vmatpush1.bf16.xpose.msra.mxu0 0
    %1335 = vmatprep.subr.bf16.mxu0 0
    %1336 = vmatpush1.bf16.xpose.msra.mxu0 0
    %1337 = vmatprep.subr.bf16.mxu0 0
    %1338 = vmatpush1.bf16.xpose.msra.mxu0 0
    %1339 = vmatprep.subr.bf16.mxu0 0
    %1340 = vmatpush1.bf16.xpose.msra.mxu0 0
    %1341 = vmatprep.subr.bf16.mxu0 0
    %1342 = vmatpush1.bf16.xpose.msra.mxu0 0
    %1343 = vmatprep.subr.bf16.mxu0 0
    %1344 = vmatpush1.bf16.xpose.msra.mxu0 0
    %1345 = vmatprep.subr.bf16.mxu0 0
    %1346 = vmatpush1.bf16.xpose.msra.mxu0 0
    %1347 = vmatprep.subr.bf16.mxu0 0
    %1348 = vmatpush1.bf16.xpose.msra.mxu0 0
    %1349 = vmatprep.subr.bf16.mxu0 0
    %1350 = vmatpush1.bf16.xpose.msra.mxu0 0
    %1351 = vmatprep.subr.bf16.mxu0 0
    %1352 = vmatpush1.bf16.xpose.msra.mxu0 0
    %1353 = vmatprep.subr.bf16.mxu0 0
    %1354 = vmatpush1.bf16.xpose.msra.mxu0 0
    %1355 = vmatprep.subr.bf16.mxu0 0
    %1356 = vmatpush1.bf16.xpose.msra.mxu0 0
    %1357 = vmatprep.subr.bf16.mxu0 0
    %1358 = vmatpush1.bf16.xpose.msra.mxu0 0
    %1359 = vmatprep.subr.bf16.mxu0 0
    %1360 = vmatpush1.bf16.xpose.msra.mxu0 0
    %1361 = vmatprep.subr.bf16.mxu0 0
    %1362 = vmatpush1.bf16.xpose.msra.mxu0 0
    %1363 = vmatprep.mubr.bf16.mxu0 0
    %1364 = vmatmul.mubr.bf16.gmra.mrb[0].mxu0 %v1326
    %v1365 = vpop.f32.mrb[0].mxu0
    %v1366 = vadd.f32 %v196, %v1365
    %v1367 = vpop.f32.mrb[0].mxu0
    %v1368 = vpop.f32.mrb[0].mxu0
    %v1369 = vpop.f32.mrb[0].mxu0
    %1370 = vdwg.mxu0
    %v1371 = vsel %vm298, %v1316, -inf
    %1372 = vmax.xlane.f32.xlu0 %v1371
    %v1373 = vpop.xlane.xlu0 %1372
    %v1374 = vsel %vm298, %v1366, -inf
    %1375 = vmax.xlane.f32.xlu0 %v1374
    %v1376 = vpop.xlane.xlu0 %1375
    %v1377 = vsub.f32 %v1316, %v1373
    %v1378 = vsub.f32 %v1366, %v1376
    %v1379 = vmul.f32 %v1377, 1.442695
    %v1380 = vpow.pop %v1379
    %v1381 = vmul.f32 %v1378, 1.442695
    %v1382 = vpow.pop %v1381
    %v1383 = vsel %vm298, %v1380, 0.0
    %1384 = vadd.xlane.f32.xlu0 %v1383
    %v1385 = vpop.xlane.xlu0 %1384
    %v1386 = vsel %vm298, %v1382, 0.0
    %1387 = vadd.xlane.f32.xlu0 %v1386
    %v1388 = vpop.xlane.xlu0 %1387
    %v1389 = vpack.c.bf16 %v1380, %v1380
    %v1390 = vpack.c.bf16 %v1382, %v1382
    %1391 = vrot.lane.b32.xlu0 %v1051, 48
    %v1392 = vpop.permute.xlu0 %1391
    %v1394 = vsel %vm298, %v1389, 0
    %v1397 = vsel %vm324, %v1392, 0
    %1399 = vmatprep.subr.bf16.mxu0 0
    %1400 = vmatpush1.bf16.msra.mxu0 %v1397
    %1401 = vmatprep.subr.bf16.mxu0 0
    %1402 = vmatpush1.bf16.msra.mxu0 0
    %1403 = vmatprep.subr.bf16.mxu0 0
    %1404 = vmatpush1.bf16.msra.mxu0 0
    %1405 = vmatprep.subr.bf16.mxu0 0
    %1406 = vmatpush1.bf16.msra.mxu0 0
    %1407 = vmatprep.subr.bf16.mxu0 0
    %1408 = vmatpush1.bf16.msra.mxu0 0
    %1409 = vmatprep.subr.bf16.mxu0 0
    %1410 = vmatpush1.bf16.msra.mxu0 0
    %1411 = vmatprep.subr.bf16.mxu0 0
    %1412 = vmatpush1.bf16.msra.mxu0 0
    %1413 = vmatprep.subr.bf16.mxu0 0
    %1414 = vmatpush1.bf16.msra.mxu0 0
    %1415 = vmatprep.subr.bf16.mxu0 0
    %1416 = vmatpush1.bf16.msra.mxu0 0
    %1417 = vmatprep.subr.bf16.mxu0 0
    %1418 = vmatpush1.bf16.msra.mxu0 0
    %1419 = vmatprep.subr.bf16.mxu0 0
    %1420 = vmatpush1.bf16.msra.mxu0 0
    %1421 = vmatprep.subr.bf16.mxu0 0
    %1422 = vmatpush1.bf16.msra.mxu0 0
    %1423 = vmatprep.subr.bf16.mxu0 0
    %1424 = vmatpush1.bf16.msra.mxu0 0
    %1425 = vmatprep.subr.bf16.mxu0 0
    %1426 = vmatpush1.bf16.msra.mxu0 0
    %1427 = vmatprep.subr.bf16.mxu0 0
    %1428 = vmatpush1.bf16.msra.mxu0 0
    %1429 = vmatprep.subr.bf16.mxu0 0
    %1430 = vmatpush1.bf16.msra.mxu0 0
    %1431 = vmatprep.mubr.bf16.mxu0 0
    %1432 = vmatmul.mubr.bf16.gmra.mrb[0].mxu0 %v1394
    %v1433 = vpop.f32.mrb[0].mxu0
    %v1434 = vadd.f32 0.0, %v1433
    %v1435 = vpop.f32.mrb[0].mxu0
    %v1436 = vpop.f32.mrb[0].mxu0
    %v1437 = vpop.f32.mrb[0].mxu0
    %1438 = vdwg.mxu0
    %1439 = vrot.lane.b32.xlu0 %v1052, 48
    %v1440 = vpop.permute.xlu0 %1439
    %v1442 = vsel %vm298, %v1390, 0
    %v1445 = vsel %vm324, %v1440, 0
    %1447 = vmatprep.subr.bf16.mxu0 0
    %1448 = vmatpush1.bf16.msra.mxu0 %v1445
    %1449 = vmatprep.subr.bf16.mxu0 0
    %1450 = vmatpush1.bf16.msra.mxu0 0
    %1451 = vmatprep.subr.bf16.mxu0 0
    %1452 = vmatpush1.bf16.msra.mxu0 0
    %1453 = vmatprep.subr.bf16.mxu0 0
    %1454 = vmatpush1.bf16.msra.mxu0 0
    %1455 = vmatprep.subr.bf16.mxu0 0
    %1456 = vmatpush1.bf16.msra.mxu0 0
    %1457 = vmatprep.subr.bf16.mxu0 0
    %1458 = vmatpush1.bf16.msra.mxu0 0
    %1459 = vmatprep.subr.bf16.mxu0 0
    %1460 = vmatpush1.bf16.msra.mxu0 0
    %1461 = vmatprep.subr.bf16.mxu0 0
    %1462 = vmatpush1.bf16.msra.mxu0 0
    %1463 = vmatprep.subr.bf16.mxu0 0
    %1464 = vmatpush1.bf16.msra.mxu0 0
    %1465 = vmatprep.subr.bf16.mxu0 0
    %1466 = vmatpush1.bf16.msra.mxu0 0
    %1467 = vmatprep.subr.bf16.mxu0 0
    %1468 = vmatpush1.bf16.msra.mxu0 0
    %1469 = vmatprep.subr.bf16.mxu0 0
    %1470 = vmatpush1.bf16.msra.mxu0 0
    %1471 = vmatprep.subr.bf16.mxu0 0
    %1472 = vmatpush1.bf16.msra.mxu0 0
    %1473 = vmatprep.subr.bf16.mxu0 0
    %1474 = vmatpush1.bf16.msra.mxu0 0
    %1475 = vmatprep.subr.bf16.mxu0 0
    %1476 = vmatpush1.bf16.msra.mxu0 0
    %1477 = vmatprep.subr.bf16.mxu0 0
    %1478 = vmatpush1.bf16.msra.mxu0 0
    %1479 = vmatprep.mubr.bf16.mxu0 0
    %1480 = vmatmul.mubr.bf16.gmra.mrb[0].mxu0 %v1442
    %v1481 = vpop.f32.mrb[0].mxu0
    %v1482 = vadd.f32 0.0, %v1481
    %v1483 = vpop.f32.mrb[0].mxu0
    %v1484 = vpop.f32.mrb[0].mxu0
    %v1485 = vpop.f32.mrb[0].mxu0
    %1486 = vdwg.mxu0
    %v1487 = vrcp.pop %v1385
    %v1488 = vrcp.pop %v1388
    %v1489 = vmul.f32 %v1434, %v1487
    %v1490 = vmul.f32 %v1482, %v1488
    %1493 = vrot.lane.b32.xlu0 %v1489, 16
    %v1494 = vpop.permute.xlu0 %1493
    %1495 = vrot.lane.b32.xlu0 %v1490, 16
    %v1496 = vpop.permute.xlu0 %1495
    %v1499 = vsel %vm202, %v1269, %v1494
    %v1500 = vsel %vm202, %v1270, %v1496
    %v1501 = vpack.c.bf16 %v1500, %v1499
    %s1502 = scalar_lea.vmem %s6, 16
    %v1503 = vld [vmem:[%s1502] sm:$0xf]
    %v1504 = vld [vmem:[%s1502 + $0x4] sm:$0xf]
    %v1505 = vld [vmem:[%s1502 + $0x8] sm:$0xf]
    %v1506 = vld [vmem:[%s1502 + $0xc] sm:$0xf]
    %s1507 = scalar_lea.vmem %s7, 1
    %v1508 = vld [vmem:[%s1507] sm:$0x1]
    %v1510 = vlaneseq
    %v1511 = vshrl.u32 %v1510, 7
    %v1512 = vsub.s32 0, %v1511
    %v1513 = vrot.slane %v1508, %v1512
    %v1519 = vunpack.c.l.b16 %v1503
    %v1520 = vunpack.c.l.b16 %v1504
    %v1521 = vunpack.c.l.b16 %v1505
    %v1522 = vunpack.c.l.b16 %v1506
    %v1523 = vpack.c.b16 %v1520, %v1519
    %v1524 = vpack.c.b16 %v1522, %v1521
    %v1528 = vsel %vm71, %v1501, 0
    %1530 = vmatprep.subr.bf16.mxu0 0
    %1531 = vmatpush1.bf16.msra.mxu0 %v1523
    %1532 = vmatprep.subr.bf16.mxu0 0
    %1533 = vmatpush1.bf16.msra.mxu0 %v1524
    %1534 = vmatprep.subr.bf16.mxu0 0
    %1535 = vmatpush1.bf16.msra.mxu0 0
    %1536 = vmatprep.subr.bf16.mxu0 0
    %1537 = vmatpush1.bf16.msra.mxu0 0
    %1538 = vmatprep.subr.bf16.mxu0 0
    %1539 = vmatpush1.bf16.msra.mxu0 0
    %1540 = vmatprep.subr.bf16.mxu0 0
    %1541 = vmatpush1.bf16.msra.mxu0 0
    %1542 = vmatprep.subr.bf16.mxu0 0
    %1543 = vmatpush1.bf16.msra.mxu0 0
    %1544 = vmatprep.subr.bf16.mxu0 0
    %1545 = vmatpush1.bf16.msra.mxu0 0
    %1546 = vmatprep.subr.bf16.mxu0 0
    %1547 = vmatpush1.bf16.msra.mxu0 0
    %1548 = vmatprep.subr.bf16.mxu0 0
    %1549 = vmatpush1.bf16.msra.mxu0 0
    %1550 = vmatprep.subr.bf16.mxu0 0
    %1551 = vmatpush1.bf16.msra.mxu0 0
    %1552 = vmatprep.subr.bf16.mxu0 0
    %1553 = vmatpush1.bf16.msra.mxu0 0
    %1554 = vmatprep.subr.bf16.mxu0 0
    %1555 = vmatpush1.bf16.msra.mxu0 0
    %1556 = vmatprep.subr.bf16.mxu0 0
    %1557 = vmatpush1.bf16.msra.mxu0 0
    %1558 = vmatprep.subr.bf16.mxu0 0
    %1559 = vmatpush1.bf16.msra.mxu0 0
    %1560 = vmatprep.subr.bf16.mxu0 0
    %1561 = vmatpush1.bf16.msra.mxu0 0
    %1562 = vmatprep.mubr.bf16.mxu0 0
    %1563 = vmatmul.mubr.bf16.gmra.mrb[0].mxu0 %v1528
    %v1564 = vpop.f32.mrb[0].mxu0
    %v1565 = vadd.f32 %v1513, %v1564
    %v1566 = vpop.f32.mrb[0].mxu0
    %v1567 = vpop.f32.mrb[0].mxu0
    %v1568 = vadd.f32 %v1513, %v1567
    %v1569 = vpop.f32.mrb[0].mxu0
    %1570 = vdwg.mxu0
    %v1571 = vadd.f32 %v1565, %v979
    %v1572 = vadd.f32 %v1568, %v980
    %s1573 = scalar_lea.vmem %s8, 1
    %v1574 = vld [vmem:[%s1573] sm:$0x1]
    %s1575 = scalar_lea.vmem %s9, 1
    %v1576 = vld [vmem:[%s1575] sm:$0x1]
    %v1577 = vsel %vm71, %v1571, 0.0
    %1578 = vadd.xlane.f32.xlu0 %v1577
    %v1579 = vpop.xlane.xlu0 %1578
    %v1580 = vsel %vm71, %v1572, 0.0
    %1581 = vadd.xlane.f32.xlu0 %v1580
    %v1582 = vpop.xlane.xlu0 %1581
    %v1583 = vmul.f32 %v1579, %v78
    %v1584 = vmul.f32 %v1582, %v78
    %v1585 = vsub.f32 %v1571, %v1583
    %v1586 = vsub.f32 %v1572, %v1584
    %v1587 = vmul.f32 %v1585, %v1585
    %v1588 = vmul.f32 %v1586, %v1586
    %v1589 = vsel %vm71, %v1587, 0.0
    %1590 = vadd.xlane.f32.xlu0 %v1589
    %v1591 = vpop.xlane.xlu0 %1590
    %v1592 = vsel %vm71, %v1588, 0.0
    %1593 = vadd.xlane.f32.xlu0 %v1592
    %v1594 = vpop.xlane.xlu0 %1593
    %v1595 = vmul.f32 %v1591, %v78
    %v1596 = vmul.f32 %v1594, %v78
    %v1597 = vadd.f32 %v1595, 1e-12
    %v1598 = vadd.f32 %v1596, 1e-12
    %v1599 = vrsqrt.pop %v1597
    %v1600 = vrsqrt.pop %v1598
    %v1601 = vmul.f32 %v1585, %v1599
    %v1602 = vmul.f32 %v1586, %v1600
    %v1604 = vlaneseq
    %v1605 = vshrl.u32 %v1604, 7
    %v1606 = vsub.s32 0, %v1605
    %v1607 = vrot.slane %v1574, %v1606
    %v1609 = vmul.f32 %v1601, %v1607
    %v1610 = vmul.f32 %v1602, %v1607
    %v1612 = vlaneseq
    %v1613 = vshrl.u32 %v1612, 7
    %v1614 = vsub.s32 0, %v1613
    %v1615 = vrot.slane %v1576, %v1614
    %v1617 = vadd.f32 %v1609, %v1615
    %v1618 = vadd.f32 %v1610, %v1615
    %v1619 = vpack.c.bf16 %v1618, %v1617
    %s1620 = scalar_lea.vmem %s10, 16
    %v1621 = vld [vmem:[%s1620] sm:$0xf]
    %v1622 = vld [vmem:[%s1620 + $0x4] sm:$0xf]
    %v1623 = vld [vmem:[%s1620 + $0x8] sm:$0xf]
    %v1624 = vld [vmem:[%s1620 + $0xc] sm:$0xf]
    %s1625 = scalar_lea.vmem %s11, 1
    %v1626 = vld [vmem:[%s1625] sm:$0x1]
    %v1628 = vlaneseq
    %v1629 = vshrl.u32 %v1628, 7
    %v1630 = vsub.s32 0, %v1629
    %v1631 = vrot.slane %v1626, %v1630
    %v1637 = vunpack.c.l.b16 %v1621
    %v1638 = vunpack.c.l.b16 %v1622
    %v1639 = vunpack.c.l.b16 %v1623
    %v1640 = vunpack.c.l.b16 %v1624
    %v1641 = vpack.c.b16 %v1638, %v1637
    %v1642 = vpack.c.b16 %v1640, %v1639
    %v1646 = vsel %vm71, %v1619, 0
    %1648 = vmatprep.subr.bf16.mxu0 0
    %1649 = vmatpush1.bf16.msra.mxu0 %v1641
    %1650 = vmatprep.subr.bf16.mxu0 0
    %1651 = vmatpush1.bf16.msra.mxu0 %v1642
    %1652 = vmatprep.subr.bf16.mxu0 0
    %1653 = vmatpush1.bf16.msra.mxu0 0
    %1654 = vmatprep.subr.bf16.mxu0 0
    %1655 = vmatpush1.bf16.msra.mxu0 0
    %1656 = vmatprep.subr.bf16.mxu0 0
    %1657 = vmatpush1.bf16.msra.mxu0 0
    %1658 = vmatprep.subr.bf16.mxu0 0
    %1659 = vmatpush1.bf16.msra.mxu0 0
    %1660 = vmatprep.subr.bf16.mxu0 0
    %1661 = vmatpush1.bf16.msra.mxu0 0
    %1662 = vmatprep.subr.bf16.mxu0 0
    %1663 = vmatpush1.bf16.msra.mxu0 0
    %1664 = vmatprep.subr.bf16.mxu0 0
    %1665 = vmatpush1.bf16.msra.mxu0 0
    %1666 = vmatprep.subr.bf16.mxu0 0
    %1667 = vmatpush1.bf16.msra.mxu0 0
    %1668 = vmatprep.subr.bf16.mxu0 0
    %1669 = vmatpush1.bf16.msra.mxu0 0
    %1670 = vmatprep.subr.bf16.mxu0 0
    %1671 = vmatpush1.bf16.msra.mxu0 0
    %1672 = vmatprep.subr.bf16.mxu0 0
    %1673 = vmatpush1.bf16.msra.mxu0 0
    %1674 = vmatprep.subr.bf16.mxu0 0
    %1675 = vmatpush1.bf16.msra.mxu0 0
    %1676 = vmatprep.subr.bf16.mxu0 0
    %1677 = vmatpush1.bf16.msra.mxu0 0
    %1678 = vmatprep.subr.bf16.mxu0 0
    %1679 = vmatpush1.bf16.msra.mxu0 0
    %1680 = vmatprep.mubr.bf16.mxu0 0
    %1681 = vmatmul.mubr.bf16.gmra.mrb[0].mxu0 %v1646
    %v1682 = vpop.f32.mrb[0].mxu0
    %v1683 = vadd.f32 %v1631, %v1682
    %v1684 = vpop.f32.mrb[0].mxu0
    %v1685 = vpop.f32.mrb[0].mxu0
    %v1686 = vadd.f32 %v1631, %v1685
    %v1687 = vpop.f32.mrb[0].mxu0
    %1688 = vdwg.mxu0
    %v1689 = vmul.f32 %v1683, %v1683
    %v1690 = vmul.f32 %v1686, %v1686
    %v1691 = vmul.f32 %v1683, %v1689
    %v1692 = vmul.f32 %v1686, %v1690
    %v1693 = vmul.f32 %v1691, 0.044715
    %v1694 = vmul.f32 %v1692, 0.044715
    %v1695 = vadd.f32 %v1683, %v1693
    %v1696 = vadd.f32 %v1686, %v1694
    %v1697 = vmul.f32 %v1695, 0.7978846
    %v1698 = vmul.f32 %v1696, 0.7978846
    %v1699 = vtanh.pop %v1697
    %v1700 = vtanh.pop %v1698
    %v1701 = vadd.f32 %v1699, 1.0
    %v1702 = vadd.f32 %v1700, 1.0
    %v1703 = vmul.f32 %v1701, 0.5
    %v1704 = vmul.f32 %v1702, 0.5
    %v1705 = vmul.f32 %v1683, %v1703
    %v1706 = vmul.f32 %v1686, %v1704
    %v1707 = vpack.c.bf16 %v1706, %v1705
    %s1708 = scalar_lea.vmem %s12, 32
    %v1709 = vld [vmem:[%s1708] sm:$0xf]
    %v1710 = vld [vmem:[%s1708 + $0x4] sm:$0xf]
    %v1711 = vld [vmem:[%s1708 + $0x8] sm:$0xf]
    %v1712 = vld [vmem:[%s1708 + $0xc] sm:$0xf]
    %v1713 = vld [vmem:[%s1708 + $0x10] sm:$0xf]
    %v1714 = vld [vmem:[%s1708 + $0x14] sm:$0xf]
    %v1715 = vld [vmem:[%s1708 + $0x18] sm:$0xf]
    %v1716 = vld [vmem:[%s1708 + $0x1c] sm:$0xf]
    %s1717 = scalar_lea.vmem %s13, 1
    %v1718 = vld [vmem:[%s1717] sm:$0x1]
    %v1720 = vlaneseq
    %v1721 = vshrl.u32 %v1720, 7
    %v1722 = vsub.s32 0, %v1721
    %v1723 = vrot.slane %v1718, %v1722
    %v1733 = vunpack.c.l.b16 %v1709
    %v1734 = vunpack.c.l.b16 %v1710
    %v1735 = vunpack.c.l.b16 %v1711
    %v1736 = vunpack.c.l.b16 %v1712
    %v1737 = vunpack.c.l.b16 %v1713
    %v1738 = vunpack.c.l.b16 %v1714
    %v1739 = vunpack.c.l.b16 %v1715
    %v1740 = vunpack.c.l.b16 %v1716
    %v1741 = vpack.c.b16 %v1734, %v1733
    %v1742 = vpack.c.b16 %v1736, %v1735
    %v1743 = vpack.c.b16 %v1738, %v1737
    %v1744 = vpack.c.b16 %v1740, %v1739
    %v1750 = vsel %vm890, %v1707, 0
    %1752 = vmatprep.subr.bf16.mxu0 0
    %1753 = vmatpush1.bf16.msra.mxu0 %v1741
    %1754 = vmatprep.subr.bf16.mxu0 0
    %1755 = vmatpush1.bf16.msra.mxu0 %v1742
    %1756 = vmatprep.subr.bf16.mxu0 0
    %1757 = vmatpush1.bf16.msra.mxu0 %v1743
    %1758 = vmatprep.subr.bf16.mxu0 0
    %1759 = vmatpush1.bf16.msra.mxu0 %v1744
    %1760 = vmatprep.subr.bf16.mxu0 0
    %1761 = vmatpush1.bf16.msra.mxu0 0
    %1762 = vmatprep.subr.bf16.mxu0 0
    %1763 = vmatpush1.bf16.msra.mxu0 0
    %1764 = vmatprep.subr.bf16.mxu0 0
    %1765 = vmatpush1.bf16.msra.mxu0 0
    %1766 = vmatprep.subr.bf16.mxu0 0
    %1767 = vmatpush1.bf16.msra.mxu0 0
    %1768 = vmatprep.subr.bf16.mxu0 0
    %1769 = vmatpush1.bf16.msra.mxu0 0
    %1770 = vmatprep.subr.bf16.mxu0 0
    %1771 = vmatpush1.bf16.msra.mxu0 0
    %1772 = vmatprep.subr.bf16.mxu0 0
    %1773 = vmatpush1.bf16.msra.mxu0 0
    %1774 = vmatprep.subr.bf16.mxu0 0
    %1775 = vmatpush1.bf16.msra.mxu0 0
    %1776 = vmatprep.subr.bf16.mxu0 0
    %1777 = vmatpush1.bf16.msra.mxu0 0
    %1778 = vmatprep.subr.bf16.mxu0 0
    %1779 = vmatpush1.bf16.msra.mxu0 0
    %1780 = vmatprep.subr.bf16.mxu0 0
    %1781 = vmatpush1.bf16.msra.mxu0 0
    %1782 = vmatprep.subr.bf16.mxu0 0
    %1783 = vmatpush1.bf16.msra.mxu0 0
    %1784 = vmatprep.mubr.bf16.mxu0 0
    %1785 = vmatmul.mubr.bf16.gmra.mrb[0].mxu0 %v1750
    %v1786 = vpop.f32.mrb[0].mxu0
    %v1787 = vadd.f32 %v1723, %v1786
    %v1788 = vpop.f32.mrb[0].mxu0
    %v1789 = vpop.f32.mrb[0].mxu0
    %v1790 = vadd.f32 %v1723, %v1789
    %v1791 = vpop.f32.mrb[0].mxu0
    %1792 = vdwg.mxu0
    %v1793 = vadd.f32 %v1787, %v1617
    %v1794 = vadd.f32 %v1790, %v1618
    %s1795 = scalar_lea.vmem %s14, 1
    %v1796 = vld [vmem:[%s1795] sm:$0x1]
    %s1797 = scalar_lea.vmem %s15, 1
    %v1798 = vld [vmem:[%s1797] sm:$0x1]
    %v1799 = vsel %vm71, %v1793, 0.0
    %1800 = vadd.xlane.f32.xlu0 %v1799
    %v1801 = vpop.xlane.xlu0 %1800
    %v1802 = vsel %vm71, %v1794, 0.0
    %1803 = vadd.xlane.f32.xlu0 %v1802
    %v1804 = vpop.xlane.xlu0 %1803
    %v1805 = vmul.f32 %v1801, %v78
    %v1806 = vmul.f32 %v1804, %v78
    %v1807 = vsub.f32 %v1793, %v1805
    %v1808 = vsub.f32 %v1794, %v1806
    %v1809 = vmul.f32 %v1807, %v1807
    %v1810 = vmul.f32 %v1808, %v1808
    %v1811 = vsel %vm71, %v1809, 0.0
    %1812 = vadd.xlane.f32.xlu0 %v1811
    %v1813 = vpop.xlane.xlu0 %1812
    %v1814 = vsel %vm71, %v1810, 0.0
    %1815 = vadd.xlane.f32.xlu0 %v1814
    %v1816 = vpop.xlane.xlu0 %1815
    %v1817 = vmul.f32 %v1813, %v78
    %v1818 = vmul.f32 %v1816, %v78
    %v1819 = vadd.f32 %v1817, 1e-12
    %v1820 = vadd.f32 %v1818, 1e-12
    %v1821 = vrsqrt.pop %v1819
    %v1822 = vrsqrt.pop %v1820
    %v1823 = vmul.f32 %v1807, %v1821
    %v1824 = vmul.f32 %v1808, %v1822
    %v1826 = vlaneseq
    %v1827 = vshrl.u32 %v1826, 7
    %v1828 = vsub.s32 0, %v1827
    %v1829 = vrot.slane %v1796, %v1828
    %v1831 = vmul.f32 %v1823, %v1829
    %v1832 = vmul.f32 %v1824, %v1829
    %v1834 = vlaneseq
    %v1835 = vshrl.u32 %v1834, 7
    %v1836 = vsub.s32 0, %v1835
    %v1837 = vrot.slane %v1798, %v1836
    %v1839 = vadd.f32 %v1831, %v1837
    %v1840 = vadd.f32 %v1832, %v1837
    %v1841 = vpack.c.bf16 %v1839, %v1839
    %v1842 = vpack.c.bf16 %v1840, %v1840
    %v1843 = vld [vmem:[%s16] sm:$0xf]
    %v1844 = vld [vmem:[%s16 + $0x4] sm:$0xf]
    %v1845 = vld [vmem:[%s16 + $0x8] sm:$0xf]
    %v1846 = vld [vmem:[%s16 + $0xc] sm:$0xf]
    %v1847 = vld [vmem:[%s17] sm:$0x1]
    %v1849 = vlaneseq
    %v1850 = vshrl.u32 %v1849, 7
    %v1851 = vsub.s32 0, %v1850
    %v1852 = vrot.slane %v1847, %v1851
    %v1856 = vunpack.c.l.b16 %v1841
    %v1857 = vunpack.c.l.b16 %v1842
    %v1858 = vrot.slane %v1857, 7
    %vm1859 = vcmask 1041409
    %v1860 = vsel %vm1859, %v1858, %v1856
    %v1861 = vpack.c.b16 %v1860, %v1860
    %v1866 = vunpack.c.l.b16 %v1843
    %v1867 = vunpack.c.l.b16 %v1844
    %v1868 = vunpack.c.l.b16 %v1845
    %v1869 = vunpack.c.l.b16 %v1846
    %v1870 = vpack.c.b16 %v1867, %v1866
    %v1871 = vpack.c.b16 %v1869, %v1868
    %v1875 = vsel %vm71, %v1861, 0
    %1877 = vmatprep.subr.bf16.mxu0 0
    %1878 = vmatpush1.bf16.msra.mxu0 %v1870
    %1879 = vmatprep.subr.bf16.mxu0 0
    %1880 = vmatpush1.bf16.msra.mxu0 %v1871
    %1881 = vmatprep.subr.bf16.mxu0 0
    %1882 = vmatpush1.bf16.msra.mxu0 0
    %1883 = vmatprep.subr.bf16.mxu0 0
    %1884 = vmatpush1.bf16.msra.mxu0 0
    %1885 = vmatprep.subr.bf16.mxu0 0
    %1886 = vmatpush1.bf16.msra.mxu0 0
    %1887 = vmatprep.subr.bf16.mxu0 0
    %1888 = vmatpush1.bf16.msra.mxu0 0
    %1889 = vmatprep.subr.bf16.mxu0 0
    %1890 = vmatpush1.bf16.msra.mxu0 0
    %1891 = vmatprep.subr.bf16.mxu0 0
    %1892 = vmatpush1.bf16.msra.mxu0 0
    %1893 = vmatprep.subr.bf16.mxu0 0
    %1894 = vmatpush1.bf16.msra.mxu0 0
    %1895 = vmatprep.subr.bf16.mxu0 0
    %1896 = vmatpush1.bf16.msra.mxu0 0
    %1897 = vmatprep.subr.bf16.mxu0 0
    %1898 = vmatpush1.bf16.msra.mxu0 0
    %1899 = vmatprep.subr.bf16.mxu0 0
    %1900 = vmatpush1.bf16.msra.mxu0 0
    %1901 = vmatprep.subr.bf16.mxu0 0
    %1902 = vmatpush1.bf16.msra.mxu0 0
    %1903 = vmatprep.subr.bf16.mxu0 0
    %1904 = vmatpush1.bf16.msra.mxu0 0
    %1905 = vmatprep.subr.bf16.mxu0 0
    %1906 = vmatpush1.bf16.msra.mxu0 0
    %1907 = vmatprep.subr.bf16.mxu0 0
    %1908 = vmatpush1.bf16.msra.mxu0 0
    %1909 = vmatprep.mubr.bf16.mxu0 0
    %1910 = vmatmul.mubr.bf16.gmra.mrb[0].mxu0 %v1875
    %v1911 = vpop.f32.mrb[0].mxu0
    %v1912 = vadd.f32 %v1852, %v1911
    %v1913 = vpop.f32.mrb[0].mxu0
    %v1914 = vpop.f32.mrb[0].mxu0
    %v1915 = vpop.f32.mrb[0].mxu0
    %1916 = vdwg.mxu0
    %v1917 = vtanh.pop %v1912
    %v1918 = vpack.c.bf16 %v1917, %v1917
    %v1919 = vld [vmem:[%s18] sm:$0xf]
    %v1920 = vld [vmem:[%s18 + $0x4] sm:$0xf]
    %v1921 = vld [vmem:[%s18 + $0x8] sm:$0xf]
    %v1922 = vld [vmem:[%s18 + $0xc] sm:$0xf]
    %v1923 = vld [vmem:[%s19] sm:$0x1]
    %v1925 = vlaneseq
    %v1926 = vshrl.u32 %v1925, 7
    %v1927 = vsub.s32 0, %v1926
    %v1928 = vrot.slane %v1923, %v1927
    %v1934 = vunpack.c.l.b16 %v1919
    %v1935 = vunpack.c.l.b16 %v1920
    %v1936 = vunpack.c.l.b16 %v1921
    %v1937 = vunpack.c.l.b16 %v1922
    %v1938 = vpack.c.b16 %v1935, %v1934
    %v1939 = vpack.c.b16 %v1937, %v1936
    %v1943 = vsel %vm71, %v1918, 0
    %1945 = vmatprep.subr.bf16.mxu0 0
    %1946 = vmatpush1.bf16.msra.mxu0 %v1938
    %1947 = vmatprep.subr.bf16.mxu0 0
    %1948 = vmatpush1.bf16.msra.mxu0 %v1939
    %1949 = vmatprep.subr.bf16.mxu0 0
    %1950 = vmatpush1.bf16.msra.mxu0 0
    %1951 = vmatprep.subr.bf16.mxu0 0
    %1952 = vmatpush1.bf16.msra.mxu0 0
    %1953 = vmatprep.subr.bf16.mxu0 0
    %1954 = vmatpush1.bf16.msra.mxu0 0
    %1955 = vmatprep.subr.bf16.mxu0 0
    %1956 = vmatpush1.bf16.msra.mxu0 0
    %1957 = vmatprep.subr.bf16.mxu0 0
    %1958 = vmatpush1.bf16.msra.mxu0 0
    %1959 = vmatprep.subr.bf16.mxu0 0
    %1960 = vmatpush1.bf16.msra.mxu0 0
    %1961 = vmatprep.subr.bf16.mxu0 0
    %1962 = vmatpush1.bf16.msra.mxu0 0
    %1963 = vmatprep.subr.bf16.mxu0 0
    %1964 = vmatpush1.bf16.msra.mxu0 0
    %1965 = vmatprep.subr.bf16.mxu0 0
    %1966 = vmatpush1.bf16.msra.mxu0 0
    %1967 = vmatprep.subr.bf16.mxu0 0
    %1968 = vmatpush1.bf16.msra.mxu0 0
    %1969 = vmatprep.subr.bf16.mxu0 0
    %1970 = vmatpush1.bf16.msra.mxu0 0
    %1971 = vmatprep.subr.bf16.mxu0 0
    %1972 = vmatpush1.bf16.msra.mxu0 0
    %1973 = vmatprep.subr.bf16.mxu0 0
    %1974 = vmatpush1.bf16.msra.mxu0 0
    %1975 = vmatprep.subr.bf16.mxu0 0
    %1976 = vmatpush1.bf16.msra.mxu0 0
    %1977 = vmatprep.mubr.bf16.mxu0 0
    %1978 = vmatmul.mubr.bf16.gmra.mrb[0].mxu0 %v1943
    %v1979 = vpop.f32.mrb[0].mxu0
    %v1980 = vadd.f32 %v1928, %v1979
    %v1981 = vpop.f32.mrb[0].mxu0
    %v1982 = vpop.f32.mrb[0].mxu0
    %v1983 = vpop.f32.mrb[0].mxu0
    %1984 = vdwg.mxu0
    %v1985 = vmax.f32 %v1980, 0.0
    %1986 = vst [vmem:[#allocation2] sm:$0x3] %v1985
    // Predicated region
    $region82: #{bert_classifier_forward.1} parent=1 // pred_check
      _
    $region83: #{bert_classifier_forward.1} parent=1 // pred_check_branch
      %1988 = sbr.rel (0) target = $region85
    $region84: #{bert_classifier_forward.1} parent=1 // pred_region
      %s1990 = ssub.s32 32, 32
      %1991 = vsyncadd [#allocation3], %s1990
      %s1993 = sshll.u32 [#allocation2], 4
      %s1994 = int_to_ptr.vmem [resolvable:$true] %s1993
      %1996 = dma.vmem_to_hbm [thread:$0]  %s1994, 32, %s20, [#allocation3]
    $region85: #{bert_classifier_forward.1} parent=1 // pred_fallthru
      _
    // Predicated region
    $region86: #{bert_classifier_forward.1} parent=1 // pred_check
      _
    $region87: #{bert_classifier_forward.1} parent=1 // pred_check_branch
      %1998 = sbr.rel (0) target = $region89
    $region88: #{bert_classifier_forward.1} parent=1 // pred_region
      %1999 = dma.done [#allocation3], 32
    $region89: #{bert_classifier_forward.1} parent=1 // pred_fallthru
      _
    %2000 = vsyncpa [#allocation3], 1

</llo_original>
